<compile_context>
chip_gen: v6e
topology: v6e:2x2x1
jax: 0.10.0
libtpu: 0.0.40
codegen_flags: <defaults>
</compile_context>

<pallas_src>
import jax
import jax.numpy as jnp
from jax.experimental import pallas as pl
from jax.experimental.pallas import tpu as pltpu


def _round_up(x, m):
    return ((x + m - 1) // m) * m


def bomcnn_kernel(tok_ref, freq_ref, emb_ref, wconv_ref, bconv_ref,
                  w1p_ref, w1f_ref, b1_ref, w2_ref, b2_ref, out_ref):
    # tok_ref:  (TB, L)            int32  token ids for this batch tile
    # freq_ref: (TB, F_pad)        bf16
    # emb_ref:  (V_pad, E_pad)     bf16   padded embedding table
    # wconv_ref:(E_pad, 3 * C_pad) bf16   columns = [tap0 | tap1 | tap2]
    # bconv/b1/b2: (1, *)          f32
    # w1p: (C_pad, H_pad)  w1f: (F_pad, H_pad)  w2: (H_pad, NL_pad)   bf16
    TB, L = tok_ref.shape
    BL = TB * L
    VP = emb_ref.shape[0]
    C = bconv_ref.shape[-1]

    # ---- Embedding lookup as a one-hot MXU matmul (V is tiny here) --------
    # TODO(synk): for large vocabularies use an HBM-resident table +
    # make_async_copy row-DMA gather instead of the one-hot matmul.
    tok = tok_ref[...]
    onehot = (tok[:, :, None] ==
              jax.lax.broadcasted_iota(jnp.int32, (TB, L, VP), 2)
              ).astype(jnp.bfloat16).reshape(BL, VP)
    x = jnp.dot(onehot, emb_ref[...],
                preferred_element_type=jnp.float32).astype(jnp.bfloat16)

    # ---- Conv1d(E -> C, k=3, pad=1) as ONE stacked MXU matmul -------------
    z = jnp.dot(x, wconv_ref[...],
                preferred_element_type=jnp.float32)            # (BL, 3*C) f32

    z_prev = z[:, 0 * C:1 * C]   # x[l] @ W[k=0]  -> contributes to y[l + 1]
    z_cent = z[:, 1 * C:2 * C]   # x[l] @ W[k=1]  -> contributes to y[l]
    z_next = z[:, 2 * C:3 * C]   # x[l] @ W[k=2]  -> contributes to y[l - 1]

    # Sequence position of every flattened row as a single (BL, 1) column
    # (broadcasts inside jnp.where; no (TB, L, C) int32 plane).
    pos = jax.lax.broadcasted_iota(jnp.int32, (TB, L, 1), 1).reshape(BL, 1)

    # Realize the +/-1 sequence shifts with XLU rolls; rows that wrapped over
    # a sample boundary are exactly where the conv saw zero padding -> 0.
    # (Each tile holds TB whole samples, so boundaries line up with pos.)
    zp = jnp.where(pos == 0, 0.0, pltpu.roll(z_prev, 1, axis=0))
    zn = jnp.where(pos == L - 1, 0.0, pltpu.roll(z_next, BL - 1, axis=0))

    y = jnp.maximum(z_cent + zp + zn + bconv_ref[...], 0.0)     # ReLU (BL, C)

    # ---- AdaptiveMaxPool1d(1): max over the sequence axis ------------------
    pooled = jnp.max(y.reshape(TB, L, C), axis=1)                # (TB, C) f32

    # ---- fc1 on split weights (no lane concat) + ReLU ----------------------
    h = jnp.dot(pooled.astype(jnp.bfloat16), w1p_ref[...],
                preferred_element_type=jnp.float32)
    h = h + jnp.dot(freq_ref[...], w1f_ref[...],
                    preferred_element_type=jnp.float32)
    h = jnp.maximum(h + b1_ref[...], 0.0)

    # ---- output linear ------------------------------------------------------
    out = jnp.dot(h.astype(jnp.bfloat16), w2_ref[...],
                  preferred_element_type=jnp.float32)
    out_ref[...] = out + b2_ref[...]


def _auto_block_b(B, L):
    """Pick the batch tile TB: aim for TB*L ~= 512 MXU rows per grid step,
    keep >= 2 grid steps when the batch is big enough (v7x has 2 TCs), and
    never pad a tiny batch up to a huge tile."""
    tb = max(8, 512 // max(L, 1))
    tb = min(tb, max(8, _round_up(B, 8)))          # don't over-pad tiny batches
    if B >= 16:
        tb = min(tb, max(8, (B // 2) // 8 * 8))    # leave room for >= 2 tiles
    return tb


def bomcnn_forward(tokens, freq_vec, params, *, block_b=None):
    """tokens: (B, L) int32, freq_vec: (B, F) f32, params in PyTorch layout."""
    emb, wconv, bconv, w1, b1, w2, b2 = params
    f32, bf16 = jnp.float32, jnp.bfloat16

    V, E = emb.shape
    C = wconv.shape[0]                 # Conv1d weight: (C_out, E, 3)
    F = freq_vec.shape[1]
    H = w1.shape[0]                    # Linear weight: (out, in)
    NL = w2.shape[0]
    B, L = tokens.shape

    V_p, E_p, C_p, F_p, H_p, NL_p = (_round_up(d, 128)
                                     for d in (V, E, C, F, H, NL))

    # --- host-side packing (zero padding keeps the math exactly equal) ------
    emb_p = jnp.zeros((V_p, E_p), f32).at[:V, :E].set(emb).astype(bf16)

    # Stack the 3 conv taps into one weight: columns [tap0 | tap1 | tap2].
    # TODO(synk): only 2*C of the 3*C_p stacked columns are non-zero; repack
    # taps into 128-lane groups if the conv matmul is the measured bottleneck.
    w_taps = jnp.transpose(wconv, (2, 1, 0))                    # (3, E, C)
    wstack = jnp.zeros((E_p, 3 * C_p), f32)
    for k in range(3):
        wstack = wstack.at[:E, k * C_p:k * C_p + C].set(w_taps[k])
    wstack = wstack.astype(bf16)
    bconv_p = jnp.zeros((1, C_p), f32).at[0, :C].set(bconv)

    # Split fc1 into pooled-part and freq-part (removes the in-kernel concat).
    w1_pool = jnp.zeros((C_p, H_p), f32).at[:C, :H].set(w1[:, :C].T).astype(bf16)
    w1_freq = jnp.zeros((F_p, H_p), f32).at[:F, :H].set(w1[:, C:].T).astype(bf16)
    b1_p = jnp.zeros((1, H_p), f32).at[0, :H].set(b1)

    w2_p = jnp.zeros((H_p, NL_p), f32).at[:H, :NL].set(w2.T).astype(bf16)
    b2_p = jnp.zeros((1, NL_p), f32).at[0, :NL].set(b2)

    freq_p = jnp.zeros((B, F_p), f32).at[:, :F].set(freq_vec).astype(bf16)
    tok = tokens.astype(jnp.int32)

    # --- batch tiling --------------------------------------------------------
    TB = _auto_block_b(B, L) if block_b is None else block_b
    B_pad = _round_up(B, TB)
    grid_n = B_pad // TB
    if grid_n > 1 and grid_n % 2 == 1:     # even grid keeps both v7x TCs busy
        grid_n += 1
        B_pad = grid_n * TB
    if B_pad != B:
        tok = jnp.pad(tok, ((0, B_pad - B), (0, 0)))
        freq_p = jnp.pad(freq_p, ((0, B_pad - B), (0, 0)))

    # Advisory cost estimate with UNPADDED dims.
    flops = (2 * B * L * V * E          # one-hot embedding matmul
             + 2 * B * L * E * 3 * C    # stacked conv matmul
             + 2 * B * (C + F) * H
             + 2 * B * H * NL)
    bytes_accessed = (tokens.size * 4 + freq_vec.size * 4 + emb.size * 2
                      + wconv.size * 2 + w1.size * 2 + w2.size * 2
                      + (bconv.size + b1.size + b2.size) * 4
                      + B * NL * 4)
    cost = pl.CostEstimate(flops=flops, transcendentals=0,
                           bytes_accessed=bytes_accessed)

    out = pl.pallas_call(
        bomcnn_kernel,
        out_shape=jax.ShapeDtypeStruct((B_pad, NL_p), jnp.float32),
        grid=(grid_n,),
        in_specs=[
            pl.BlockSpec((TB, L), lambda i: (i, 0)),           # token ids
            pl.BlockSpec((TB, F_p), lambda i: (i, 0)),         # freq
            pl.BlockSpec((V_p, E_p), lambda i: (0, 0)),        # embedding table
            pl.BlockSpec((E_p, 3 * C_p), lambda i: (0, 0)),    # stacked conv W
            pl.BlockSpec((1, C_p), lambda i: (0, 0)),          # conv bias
            pl.BlockSpec((C_p, H_p), lambda i: (0, 0)),        # w1 (pooled part)
            pl.BlockSpec((F_p, H_p), lambda i: (0, 0)),        # w1 (freq part)
            pl.BlockSpec((1, H_p), lambda i: (0, 0)),          # b1
            pl.BlockSpec((H_p, NL_p), lambda i: (0, 0)),       # w2
            pl.BlockSpec((1, NL_p), lambda i: (0, 0)),         # b2
        ],
        out_specs=pl.BlockSpec((TB, NL_p), lambda i: (i, 0)),
        compiler_params=pltpu.CompilerParams(
            dimension_semantics=("parallel",),
            # Per-step VMEM use is a few MiB even at TB*L = 1024, so 32 MiB
            # leaves double-buffering headroom on v7x's 64 MiB VMEM.
            vmem_limit_bytes=32 * 1024 * 1024),
        cost_estimate=cost,
    )(tok, freq_p, emb_p, wstack, bconv_p, w1_pool, w1_freq, b1_p, w2_p, b2_p)

    return out[:B, :NL]


def init_params(key, vocab_size, num_labels, freq_dim, embedding_dim=64,
                conv_out=64, hidden=128):
    """Parameters in the same layout as the PyTorch module."""
    ks = jax.random.split(key, 7)
    emb = 0.1 * jax.random.normal(ks[0], (vocab_size, embedding_dim), jnp.float32)
    emb = emb.at[0].set(0.0)                                   # padding_idx=0
    wconv = 0.1 * jax.random.normal(ks[1], (conv_out, embedding_dim, 3), jnp.float32)
    bconv = 0.1 * jax.random.normal(ks[2], (conv_out,), jnp.float32)
    w1 = 0.1 * jax.random.normal(ks[3], (hidden, conv_out + freq_dim), jnp.float32)
    b1 = 0.1 * jax.random.normal(ks[4], (hidden,), jnp.float32)
    w2 = 0.1 * jax.random.normal(ks[5], (num_labels, hidden), jnp.float32)
    b2 = 0.1 * jax.random.normal(ks[6], (num_labels,), jnp.float32)
    return (emb, wconv, bconv, w1, b1, w2, b2)


def bomcnn_reference(tokens, freq_vec, params):
    """Pure-JAX f32 reference mirroring the PyTorch forward (for validation)."""
    emb, wconv, bconv, w1, b1, w2, b2 = params
    L = tokens.shape[1]
    x = jnp.take(emb, tokens, axis=0)                          # (B, L, E)
    xpad = jnp.pad(x, ((0, 0), (1, 1), (0, 0)))
    w_taps = jnp.transpose(wconv, (2, 1, 0))                   # (3, E, C)
    conv = sum(jnp.einsum("ble,ec->blc", xpad[:, k:k + L, :], w_taps[k])
               for k in range(3)) + bconv[None, None, :]
    y = jnp.maximum(conv, 0.0)
    pooled = jnp.max(y, axis=1)                                # (B, C)
    feat = jnp.concatenate([pooled, freq_vec], axis=1)
    h = jnp.maximum(feat @ w1.T + b1, 0.0)
    return h @ w2.T + b2


if __name__ == "__main__":
    B, L = 32, 16           # auto tile -> TB=16, grid=(2,) (even, "parallel")
    vocab_size = 32
    embedding_dim = 64
    freq_dim = 16
    num_labels = 8

    key = jax.random.PRNGKey(0)
    k_tok, k_freq, k_param = jax.random.split(key, 3)

    tokens = jax.random.randint(k_tok, (B, L), 0, vocab_size, dtype=jnp.int32)
    freq_vec = jax.random.normal(k_freq, (B, freq_dim), jnp.float32)
    params = init_params(k_param, vocab_size, num_labels, freq_dim, embedding_dim)

    out = jax.jit(bomcnn_forward)(tokens, freq_vec, params)
    out = jax.block_until_ready(out)

    ref = bomcnn_reference(tokens, freq_vec, params)
    assert out.shape == (B, num_labels)
    # bf16 matmul inputs (f32 accumulation) vs f32 reference -> loose-ish tol.
    assert jnp.allclose(out, ref, rtol=2e-2, atol=2e-2), \
        float(jnp.max(jnp.abs(out - ref)))

    print("KERNEL_OK")
</pallas_src>

<mosaic_0001>
module attributes {stable_mosaic.version = 11 : i64} {
  func.func @bomcnn_kernel(%arg0: i32, %arg1: memref<16x16xi32, #tpu.memory_space<vmem>>, %arg2: memref<16x128xbf16, #tpu.memory_space<vmem>>, %arg3: memref<128x128xbf16, #tpu.memory_space<vmem>>, %arg4: memref<128x384xbf16, #tpu.memory_space<vmem>>, %arg5: memref<1x128xf32, #tpu.memory_space<vmem>>, %arg6: memref<128x128xbf16, #tpu.memory_space<vmem>>, %arg7: memref<128x128xbf16, #tpu.memory_space<vmem>>, %arg8: memref<1x128xf32, #tpu.memory_space<vmem>>, %arg9: memref<128x128xbf16, #tpu.memory_space<vmem>>, %arg10: memref<1x128xf32, #tpu.memory_space<vmem>>, %arg11: memref<16x128xf32, #tpu.memory_space<vmem>>) attributes {dimension_semantics = [#tpu.dimension_semantics<parallel>], iteration_bounds = array<i64: 2>, scalar_prefetch = 0 : i64, scratch_operands = 0 : i64, tpu.core_type = #tpu.core_type<tc>, window_params = [{transform_indices = @transform_0, window_bounds = array<i64: 16, 16>}, {transform_indices = @transform_1, window_bounds = array<i64: 16, 128>}, {pipeline_mode = #tpu.pipeline_mode<synchronous>, transform_indices = @transform_2, window_bounds = array<i64: 128, 128>}, {pipeline_mode = #tpu.pipeline_mode<synchronous>, transform_indices = @transform_3, window_bounds = array<i64: 128, 384>}, {pipeline_mode = #tpu.pipeline_mode<synchronous>, transform_indices = @transform_4, window_bounds = array<i64: 1, 128>}, {pipeline_mode = #tpu.pipeline_mode<synchronous>, transform_indices = @transform_5, window_bounds = array<i64: 128, 128>}, {pipeline_mode = #tpu.pipeline_mode<synchronous>, transform_indices = @transform_6, window_bounds = array<i64: 128, 128>}, {pipeline_mode = #tpu.pipeline_mode<synchronous>, transform_indices = @transform_7, window_bounds = array<i64: 1, 128>}, {pipeline_mode = #tpu.pipeline_mode<synchronous>, transform_indices = @transform_8, window_bounds = array<i64: 128, 128>}, {pipeline_mode = #tpu.pipeline_mode<synchronous>, transform_indices = @transform_9, window_bounds = array<i64: 1, 128>}, {transform_indices = @transform_10, window_bounds = array<i64: 16, 128>}]} {
    %c0 = arith.constant 0 : index
    %c0_0 = arith.constant 0 : index
    %0 = vector.load %arg1[%c0, %c0_0] : memref<16x16xi32, #tpu.memory_space<vmem>>, vector<16x16xi32>
    %1 = vector.shape_cast %0 : vector<16x16xi32> to vector<16x16x1xi32>
    %2 = tpu.iota {dimensions = array<i32: 2>} : vector<16x16x128xi32>
    %3 = vector.broadcast %1 : vector<16x16x1xi32> to vector<16x16x128xi32>
    %4 = arith.cmpi eq, %3, %2 : vector<16x16x128xi32>
    %5 = arith.extui %4 : vector<16x16x128xi1> to vector<16x16x128xi32>
    %6 = arith.sitofp %5 : vector<16x16x128xi32> to vector<16x16x128xf32>
    %7 = arith.truncf %6 : vector<16x16x128xf32> to vector<16x16x128xbf16>
    %8 = vector.shape_cast %7 : vector<16x16x128xbf16> to vector<256x128xbf16>
    %c0_1 = arith.constant 0 : index
    %c0_2 = arith.constant 0 : index
    %9 = vector.load %arg3[%c0_1, %c0_2] : memref<128x128xbf16, #tpu.memory_space<vmem>>, vector<128x128xbf16>
    %cst = arith.constant dense<0.000000e+00> : vector<256x128xf32>
    %10 = tpu.matmul %8, %9, %cst {dimension_numbers = #tpu.dot_dimension_numbers<[1], [0], [0], [1], [0, 0, 1, 1], [], []>} : vector<256x128xbf16>, vector<128x128xbf16>, vector<256x128xf32> -> vector<256x128xf32>
    %11 = arith.truncf %10 : vector<256x128xf32> to vector<256x128xbf16>
    %c0_3 = arith.constant 0 : index
    %c0_4 = arith.constant 0 : index
    %12 = vector.load %arg4[%c0_3, %c0_4] : memref<128x384xbf16, #tpu.memory_space<vmem>>, vector<128x384xbf16>
    %cst_5 = arith.constant dense<0.000000e+00> : vector<256x384xf32>
    %13 = tpu.matmul %11, %12, %cst_5 {dimension_numbers = #tpu.dot_dimension_numbers<[1], [0], [0], [1], [0, 0, 1, 1], [], []>} : vector<256x128xbf16>, vector<128x384xbf16>, vector<256x384xf32> -> vector<256x384xf32>
    %14 = vector.extract_strided_slice %13 {offsets = [0, 0], sizes = [256, 128], strides = [1, 1]} : vector<256x384xf32> to vector<256x128xf32>
    %15 = vector.extract_strided_slice %13 {offsets = [0, 128], sizes = [256, 128], strides = [1, 1]} : vector<256x384xf32> to vector<256x128xf32>
    %16 = vector.extract_strided_slice %13 {offsets = [0, 256], sizes = [256, 128], strides = [1, 1]} : vector<256x384xf32> to vector<256x128xf32>
    %17 = tpu.iota {dimensions = array<i32: 1>} : vector<16x16x1xi32>
    %18 = vector.shape_cast %17 : vector<16x16x1xi32> to vector<256x1xi32>
    %c0_i32 = arith.constant 0 : i32
    %19 = vector.broadcast %c0_i32 : i32 to vector<256x1xi32>
    %20 = arith.cmpi eq, %18, %19 : vector<256x1xi32>
    %c1_i32 = arith.constant 1 : i32
    %21 = tpu.dynamic_rotate %14 by %c1_i32 dim 0 : vector<256x128xf32>, i32 -> vector<256x128xf32>
    %cst_6 = arith.constant 0.000000e+00 : f32
    %22 = vector.shape_cast %20 : vector<256x1xi1> to vector<256x1xi1>
    %23 = vector.broadcast %22 : vector<256x1xi1> to vector<256x128xi1>
    %24 = vector.broadcast %cst_6 : f32 to vector<256x128xf32>
    %25 = arith.select %23, %24, %21 : vector<256x128xi1>, vector<256x128xf32>
    %c15_i32 = arith.constant 15 : i32
    %26 = vector.broadcast %c15_i32 : i32 to vector<256x1xi32>
    %27 = arith.cmpi eq, %18, %26 : vector<256x1xi32>
    %c255_i32 = arith.constant 255 : i32
    %28 = tpu.dynamic_rotate %16 by %c255_i32 dim 0 : vector<256x128xf32>, i32 -> vector<256x128xf32>
    %cst_7 = arith.constant 0.000000e+00 : f32
    %29 = vector.shape_cast %27 : vector<256x1xi1> to vector<256x1xi1>
    %30 = vector.broadcast %29 : vector<256x1xi1> to vector<256x128xi1>
    %31 = vector.broadcast %cst_7 : f32 to vector<256x128xf32>
    %32 = arith.select %30, %31, %28 : vector<256x128xi1>, vector<256x128xf32>
    %33 = arith.addf %15, %25 : vector<256x128xf32>
    %34 = arith.addf %33, %32 : vector<256x128xf32>
    %c0_8 = arith.constant 0 : index
    %c0_9 = arith.constant 0 : index
    %35 = vector.load %arg5[%c0_8, %c0_9] : memref<1x128xf32, #tpu.memory_space<vmem>>, vector<1x128xf32>
    %36 = vector.broadcast %35 : vector<1x128xf32> to vector<256x128xf32>
    %37 = arith.addf %34, %36 : vector<256x128xf32>
    %cst_10 = arith.constant 0.000000e+00 : f32
    %38 = vector.broadcast %cst_10 : f32 to vector<256x128xf32>
    %39 = arith.maximumf %37, %38 : vector<256x128xf32>
    %40 = vector.shape_cast %39 : vector<256x128xf32> to vector<16x16x128xf32>
    %cst_11 = arith.constant dense<0xFF800000> : vector<16x128xf32>
    %41 = vector.multi_reduction <maximumf>, %40, %cst_11 [1] : vector<16x16x128xf32> to vector<16x128xf32>
    %42 = arith.truncf %41 : vector<16x128xf32> to vector<16x128xbf16>
    %c0_12 = arith.constant 0 : index
    %c0_13 = arith.constant 0 : index
    %43 = vector.load %arg6[%c0_12, %c0_13] : memref<128x128xbf16, #tpu.memory_space<vmem>>, vector<128x128xbf16>
    %cst_14 = arith.constant dense<0.000000e+00> : vector<16x128xf32>
    %44 = tpu.matmul %42, %43, %cst_14 {dimension_numbers = #tpu.dot_dimension_numbers<[1], [0], [0], [1], [0, 0, 1, 1], [], []>} : vector<16x128xbf16>, vector<128x128xbf16>, vector<16x128xf32> -> vector<16x128xf32>
    %c0_15 = arith.constant 0 : index
    %c0_16 = arith.constant 0 : index
    %45 = vector.load %arg2[%c0_15, %c0_16] : memref<16x128xbf16, #tpu.memory_space<vmem>>, vector<16x128xbf16>
    %c0_17 = arith.constant 0 : index
    %c0_18 = arith.constant 0 : index
    %46 = vector.load %arg7[%c0_17, %c0_18] : memref<128x128xbf16, #tpu.memory_space<vmem>>, vector<128x128xbf16>
    %cst_19 = arith.constant dense<0.000000e+00> : vector<16x128xf32>
    %47 = tpu.matmul %45, %46, %cst_19 {dimension_numbers = #tpu.dot_dimension_numbers<[1], [0], [0], [1], [0, 0, 1, 1], [], []>} : vector<16x128xbf16>, vector<128x128xbf16>, vector<16x128xf32> -> vector<16x128xf32>
    %48 = arith.addf %44, %47 : vector<16x128xf32>
    %c0_20 = arith.constant 0 : index
    %c0_21 = arith.constant 0 : index
    %49 = vector.load %arg8[%c0_20, %c0_21] : memref<1x128xf32, #tpu.memory_space<vmem>>, vector<1x128xf32>
    %50 = vector.broadcast %49 : vector<1x128xf32> to vector<16x128xf32>
    %51 = arith.addf %48, %50 : vector<16x128xf32>
    %cst_22 = arith.constant 0.000000e+00 : f32
    %52 = vector.broadcast %cst_22 : f32 to vector<16x128xf32>
    %53 = arith.maximumf %51, %52 : vector<16x128xf32>
    %54 = arith.truncf %53 : vector<16x128xf32> to vector<16x128xbf16>
    %c0_23 = arith.constant 0 : index
    %c0_24 = arith.constant 0 : index
    %55 = vector.load %arg9[%c0_23, %c0_24] : memref<128x128xbf16, #tpu.memory_space<vmem>>, vector<128x128xbf16>
    %cst_25 = arith.constant dense<0.000000e+00> : vector<16x128xf32>
    %56 = tpu.matmul %54, %55, %cst_25 {dimension_numbers = #tpu.dot_dimension_numbers<[1], [0], [0], [1], [0, 0, 1, 1], [], []>} : vector<16x128xbf16>, vector<128x128xbf16>, vector<16x128xf32> -> vector<16x128xf32>
    %c0_26 = arith.constant 0 : index
    %c0_27 = arith.constant 0 : index
    %57 = vector.load %arg10[%c0_26, %c0_27] : memref<1x128xf32, #tpu.memory_space<vmem>>, vector<1x128xf32>
    %58 = vector.broadcast %57 : vector<1x128xf32> to vector<16x128xf32>
    %59 = arith.addf %56, %58 : vector<16x128xf32>
    %c0_28 = arith.constant 0 : index
    %c0_29 = arith.constant 0 : index
    %60 = vector.load %arg11[%c0_28, %c0_29] : memref<16x128xf32, #tpu.memory_space<vmem>>, vector<16x128xf32>
    tpu.vector_store %arg11[%c0_28, %c0_29], %59 {strides = array<i32>} : memref<16x128xf32, #tpu.memory_space<vmem>>, vector<16x128xf32>,
    return
  }
  func.func @transform_0(%arg0: i32) -> (i32, i32) {
    %c0_i32 = arith.constant 0 : i32
    %c0_i32_0 = arith.constant 0 : i32
    return %arg0, %c0_i32 : i32, i32
  }
  func.func @transform_1(%arg0: i32) -> (i32, i32) {
    %c0_i32 = arith.constant 0 : i32
    %c0_i32_0 = arith.constant 0 : i32
    return %arg0, %c0_i32 : i32, i32
  }
  func.func @transform_2(%arg0: i32) -> (i32, i32) {
    %c0_i32 = arith.constant 0 : i32
    %c0_i32_0 = arith.constant 0 : i32
    %c0_i32_1 = arith.constant 0 : i32
    return %c0_i32, %c0_i32_0 : i32, i32
  }
  func.func @transform_3(%arg0: i32) -> (i32, i32) {
    %c0_i32 = arith.constant 0 : i32
    %c0_i32_0 = arith.constant 0 : i32
    %c0_i32_1 = arith.constant 0 : i32
    return %c0_i32, %c0_i32_0 : i32, i32
  }
  func.func @transform_4(%arg0: i32) -> (i32, i32) {
    %c0_i32 = arith.constant 0 : i32
    %c0_i32_0 = arith.constant 0 : i32
    %c0_i32_1 = arith.constant 0 : i32
    return %c0_i32, %c0_i32_0 : i32, i32
  }
  func.func @transform_5(%arg0: i32) -> (i32, i32) {
    %c0_i32 = arith.constant 0 : i32
    %c0_i32_0 = arith.constant 0 : i32
    %c0_i32_1 = arith.constant 0 : i32
    return %c0_i32, %c0_i32_0 : i32, i32
  }
  func.func @transform_6(%arg0: i32) -> (i32, i32) {
    %c0_i32 = arith.constant 0 : i32
    %c0_i32_0 = arith.constant 0 : i32
    %c0_i32_1 = arith.constant 0 : i32
    return %c0_i32, %c0_i32_0 : i32, i32
  }
  func.func @transform_7(%arg0: i32) -> (i32, i32) {
    %c0_i32 = arith.constant 0 : i32
    %c0_i32_0 = arith.constant 0 : i32
    %c0_i32_1 = arith.constant 0 : i32
    return %c0_i32, %c0_i32_0 : i32, i32
  }
  func.func @transform_8(%arg0: i32) -> (i32, i32) {
    %c0_i32 = arith.constant 0 : i32
    %c0_i32_0 = arith.constant 0 : i32
    %c0_i32_1 = arith.constant 0 : i32
    return %c0_i32, %c0_i32_0 : i32, i32
  }
  func.func @transform_9(%arg0: i32) -> (i32, i32) {
    %c0_i32 = arith.constant 0 : i32
    %c0_i32_0 = arith.constant 0 : i32
    %c0_i32_1 = arith.constant 0 : i32
    return %c0_i32, %c0_i32_0 : i32, i32
  }
  func.func @transform_10(%arg0: i32) -> (i32, i32) {
    %c0_i32 = arith.constant 0 : i32
    %c0_i32_0 = arith.constant 0 : i32
    return %arg0, %c0_i32 : i32, i32
  }
}

</mosaic_0001>

<llo_original>
// kernel: bomcnn_forward.1
$region0: #{bomcnn_forward.1}
  #allocation0 [shape = 'u32[]', space=smem, size = 0x4, offset = 0x4, fixed_abs, tag = 'smem constant byte address 0x4 - core index']
  #allocation1 [shape = 'u32[144,128]{1,0:T(1,128)}', space=vmem, size = 0x12000, scoped, tag = 'internal scratch']
  %s0 = inlined_call_operand.vmem [shape: s32[32,16], index: 0, kind: input, shape index: {}]
  %s1 = inlined_call_operand.vmem [shape: bf16[32,128], index: 1, kind: input, shape index: {}]
  %s2 = inlined_call_operand.vmem [shape: bf16[128,128], index: 2, kind: input, shape index: {}]
  %s3 = inlined_call_operand.vmem [shape: bf16[128,384], index: 3, kind: input, shape index: {}]
  %s4 = inlined_call_operand.vmem [shape: f32[1,128], index: 4, kind: input, shape index: {}]
  %s5 = inlined_call_operand.vmem [shape: bf16[128,128], index: 5, kind: input, shape index: {}]
  %s6 = inlined_call_operand.vmem [shape: bf16[128,128], index: 6, kind: input, shape index: {}]
  %s7 = inlined_call_operand.vmem [shape: f32[1,128], index: 7, kind: input, shape index: {}]
  %s8 = inlined_call_operand.vmem [shape: bf16[128,128], index: 8, kind: input, shape index: {}]
  %s9 = inlined_call_operand.vmem [shape: f32[1,128], index: 9, kind: input, shape index: {}]
  %s10 = inlined_call_operand.vmem [shape: f32[32,128], index: 10, kind: output, shape index: {}]
  %s11 = sld [smem:[#allocation0]]
  $region73: #{bomcnn_forward.1} parent=0
    _
  %s13 = ssub.s32 1, %s11
  %s14 = scalar_select 0, %s13, %s11
  loop: start=0, step=1, limit=4
  $region2: #{bomcnn_forward.1} parent=0 // loop_pre_header
    _
  $region3: #{bomcnn_forward.1} parent=0 // loop_header
    %s16 = sphi 0, %s20
    %p17 = scmp.ge.s32.totalorder %s16, 4
    %s26 = sphi 0, %s28
    %s29 = sphi 0, %s26
    %s30 = sphi 0, %s29
    %s46 = sphi 0, %s30
    %s52 = sphi 0, %s54
    %s55 = sphi 0, %s52
    %s56 = sphi 0, %s55
    %s72 = sphi 0, %s56
    %s76 = sphi 0, %s76
    %s78 = sphi 0, %s76
    %s79 = sphi 0, %s78
    %s93 = sphi 0, %s79
    %s97 = sphi 0, %s97
    %s99 = sphi 0, %s97
    %s100 = sphi 0, %s99
    %s114 = sphi 0, %s100
    %s118 = sphi 0, %s118
    %s120 = sphi 0, %s118
    %s121 = sphi 0, %s120
    %s135 = sphi 0, %s121
    %s139 = sphi 0, %s139
    %s141 = sphi 0, %s139
    %s142 = sphi 0, %s141
    %s156 = sphi 0, %s142
    %s160 = sphi 0, %s160
    %s162 = sphi 0, %s160
    %s163 = sphi 0, %s162
    %s177 = sphi 0, %s163
    %s181 = sphi 0, %s181
    %s183 = sphi 0, %s181
    %s184 = sphi 0, %s183
    %s198 = sphi 0, %s184
    %s202 = sphi 0, %s202
    %s204 = sphi 0, %s202
    %s205 = sphi 0, %s204
    %s219 = sphi 0, %s205
    %s223 = sphi 0, %s223
    %s225 = sphi 0, %s223
    %s226 = sphi 0, %s225
    %s240 = sphi 0, %s226
    %s246 = sphi 0, %s248
    %s249 = sphi 0, %s246
    %s250 = sphi 0, %s249
    %s266 = sphi 0, %s250
  $region4: #{bomcnn_forward.1} parent=0 // loop_header_branch
    %19 = sbr.rel (%p17) target = $region8
  $region5: #{bomcnn_forward.1} parent=0 // loop_body
    %s21 = ssub.s32 %s16, 1
    %s22 = ssub.s32 %s16, 2
    %s23 = sadd.s32 %s16, 1
    %s24 = ssub.s32 %s16, %s23
    %p25 = scmp.eq.s32.totalorder %s24, 0
    %s27 = sadd.s32 %s26, 1
    %s28 = scalar_select %p25, %s26, %s27
    %p31 = pneg %p25
    %p32 = scmp.eq.s32.totalorder %s16, 1
    %p33 = por %p31, %p32
    %p34 = scmp.ne.s32.totalorder %s26, %s29
    %p35 = scmp.eq.s32.totalorder %s16, 0
    %p36 = por %p34, %p35
    %p37 = scmp.ne.s32.totalorder %s26, %s29
    %p38 = scmp.eq.s32.totalorder %s21, 1
    %p39 = por %p37, %p38
    %p40 = scmp.ne.s32.totalorder %s29, %s30
    %p41 = scmp.eq.s32.totalorder %s21, 0
    %p42 = por %p40, %p41
    %p43 = scmp.ne.s32.totalorder %s29, %s30
    %p44 = scmp.eq.s32.totalorder %s22, 1
    %p45 = por %p43, %p44
    %p47 = scmp.ne.s32.totalorder %s30, %s46
    %p48 = scmp.eq.s32.totalorder %s22, 0
    %p49 = por %p47, %p48
    %s50 = ssub.s32 %s16, %s23
    %p51 = scmp.eq.s32.totalorder %s50, 0
    %s53 = sadd.s32 %s52, 1
    %s54 = scalar_select %p51, %s52, %s53
    %p57 = pneg %p51
    %p58 = scmp.eq.s32.totalorder %s16, 1
    %p59 = por %p57, %p58
    %p60 = scmp.ne.s32.totalorder %s52, %s55
    %p61 = scmp.eq.s32.totalorder %s16, 0
    %p62 = por %p60, %p61
    %p63 = scmp.ne.s32.totalorder %s52, %s55
    %p64 = scmp.eq.s32.totalorder %s21, 1
    %p65 = por %p63, %p64
    %p66 = scmp.ne.s32.totalorder %s55, %s56
    %p67 = scmp.eq.s32.totalorder %s21, 0
    %p68 = por %p66, %p67
    %p69 = scmp.ne.s32.totalorder %s55, %s56
    %p70 = scmp.eq.s32.totalorder %s22, 1
    %p71 = por %p69, %p70
    %p73 = scmp.ne.s32.totalorder %s56, %s72
    %p74 = scmp.eq.s32.totalorder %s22, 0
    %p75 = por %p73, %p74
    %s77 = sadd.s32 %s76, 1
    %p80 = scmp.eq.s32.totalorder %s16, 1
    %p81 = scmp.ne.s32.totalorder %s76, %s78
    %p82 = scmp.eq.s32.totalorder %s16, 0
    %p83 = por %p81, %p82
    %p84 = scmp.ne.s32.totalorder %s76, %s78
    %p85 = scmp.eq.s32.totalorder %s21, 1
    %p86 = por %p84, %p85
    %p87 = scmp.ne.s32.totalorder %s78, %s79
    %p88 = scmp.eq.s32.totalorder %s21, 0
    %p89 = por %p87, %p88
    %p90 = scmp.ne.s32.totalorder %s78, %s79
    %p91 = scmp.eq.s32.totalorder %s22, 1
    %p92 = por %p90, %p91
    %p94 = scmp.ne.s32.totalorder %s79, %s93
    %p95 = scmp.eq.s32.totalorder %s22, 0
    %p96 = por %p94, %p95
    %s98 = sadd.s32 %s97, 1
    %p101 = scmp.eq.s32.totalorder %s16, 1
    %p102 = scmp.ne.s32.totalorder %s97, %s99
    %p103 = scmp.eq.s32.totalorder %s16, 0
    %p104 = por %p102, %p103
    %p105 = scmp.ne.s32.totalorder %s97, %s99
    %p106 = scmp.eq.s32.totalorder %s21, 1
    %p107 = por %p105, %p106
    %p108 = scmp.ne.s32.totalorder %s99, %s100
    %p109 = scmp.eq.s32.totalorder %s21, 0
    %p110 = por %p108, %p109
    %p111 = scmp.ne.s32.totalorder %s99, %s100
    %p112 = scmp.eq.s32.totalorder %s22, 1
    %p113 = por %p111, %p112
    %p115 = scmp.ne.s32.totalorder %s100, %s114
    %p116 = scmp.eq.s32.totalorder %s22, 0
    %p117 = por %p115, %p116
    %s119 = sadd.s32 %s118, 1
    %p122 = scmp.eq.s32.totalorder %s16, 1
    %p123 = scmp.ne.s32.totalorder %s118, %s120
    %p124 = scmp.eq.s32.totalorder %s16, 0
    %p125 = por %p123, %p124
    %p126 = scmp.ne.s32.totalorder %s118, %s120
    %p127 = scmp.eq.s32.totalorder %s21, 1
    %p128 = por %p126, %p127
    %p129 = scmp.ne.s32.totalorder %s120, %s121
    %p130 = scmp.eq.s32.totalorder %s21, 0
    %p131 = por %p129, %p130
    %p132 = scmp.ne.s32.totalorder %s120, %s121
    %p133 = scmp.eq.s32.totalorder %s22, 1
    %p134 = por %p132, %p133
    %p136 = scmp.ne.s32.totalorder %s121, %s135
    %p137 = scmp.eq.s32.totalorder %s22, 0
    %p138 = por %p136, %p137
    %s140 = sadd.s32 %s139, 1
    %p143 = scmp.eq.s32.totalorder %s16, 1
    %p144 = scmp.ne.s32.totalorder %s139, %s141
    %p145 = scmp.eq.s32.totalorder %s16, 0
    %p146 = por %p144, %p145
    %p147 = scmp.ne.s32.totalorder %s139, %s141
    %p148 = scmp.eq.s32.totalorder %s21, 1
    %p149 = por %p147, %p148
    %p150 = scmp.ne.s32.totalorder %s141, %s142
    %p151 = scmp.eq.s32.totalorder %s21, 0
    %p152 = por %p150, %p151
    %p153 = scmp.ne.s32.totalorder %s141, %s142
    %p154 = scmp.eq.s32.totalorder %s22, 1
    %p155 = por %p153, %p154
    %p157 = scmp.ne.s32.totalorder %s142, %s156
    %p158 = scmp.eq.s32.totalorder %s22, 0
    %p159 = por %p157, %p158
    %s161 = sadd.s32 %s160, 1
    %p164 = scmp.eq.s32.totalorder %s16, 1
    %p165 = scmp.ne.s32.totalorder %s160, %s162
    %p166 = scmp.eq.s32.totalorder %s16, 0
    %p167 = por %p165, %p166
    %p168 = scmp.ne.s32.totalorder %s160, %s162
    %p169 = scmp.eq.s32.totalorder %s21, 1
    %p170 = por %p168, %p169
    %p171 = scmp.ne.s32.totalorder %s162, %s163
    %p172 = scmp.eq.s32.totalorder %s21, 0
    %p173 = por %p171, %p172
    %p174 = scmp.ne.s32.totalorder %s162, %s163
    %p175 = scmp.eq.s32.totalorder %s22, 1
    %p176 = por %p174, %p175
    %p178 = scmp.ne.s32.totalorder %s163, %s177
    %p179 = scmp.eq.s32.totalorder %s22, 0
    %p180 = por %p178, %p179
    %s182 = sadd.s32 %s181, 1
    %p185 = scmp.eq.s32.totalorder %s16, 1
    %p186 = scmp.ne.s32.totalorder %s181, %s183
    %p187 = scmp.eq.s32.totalorder %s16, 0
    %p188 = por %p186, %p187
    %p189 = scmp.ne.s32.totalorder %s181, %s183
    %p190 = scmp.eq.s32.totalorder %s21, 1
    %p191 = por %p189, %p190
    %p192 = scmp.ne.s32.totalorder %s183, %s184
    %p193 = scmp.eq.s32.totalorder %s21, 0
    %p194 = por %p192, %p193
    %p195 = scmp.ne.s32.totalorder %s183, %s184
    %p196 = scmp.eq.s32.totalorder %s22, 1
    %p197 = por %p195, %p196
    %p199 = scmp.ne.s32.totalorder %s184, %s198
    %p200 = scmp.eq.s32.totalorder %s22, 0
    %p201 = por %p199, %p200
    %s203 = sadd.s32 %s202, 1
    %p206 = scmp.eq.s32.totalorder %s16, 1
    %p207 = scmp.ne.s32.totalorder %s202, %s204
    %p208 = scmp.eq.s32.totalorder %s16, 0
    %p209 = por %p207, %p208
    %p210 = scmp.ne.s32.totalorder %s202, %s204
    %p211 = scmp.eq.s32.totalorder %s21, 1
    %p212 = por %p210, %p211
    %p213 = scmp.ne.s32.totalorder %s204, %s205
    %p214 = scmp.eq.s32.totalorder %s21, 0
    %p215 = por %p213, %p214
    %p216 = scmp.ne.s32.totalorder %s204, %s205
    %p217 = scmp.eq.s32.totalorder %s22, 1
    %p218 = por %p216, %p217
    %p220 = scmp.ne.s32.totalorder %s205, %s219
    %p221 = scmp.eq.s32.totalorder %s22, 0
    %p222 = por %p220, %p221
    %s224 = sadd.s32 %s223, 1
    %p227 = scmp.eq.s32.totalorder %s16, 1
    %p228 = scmp.ne.s32.totalorder %s223, %s225
    %p229 = scmp.eq.s32.totalorder %s16, 0
    %p230 = por %p228, %p229
    %p231 = scmp.ne.s32.totalorder %s223, %s225
    %p232 = scmp.eq.s32.totalorder %s21, 1
    %p233 = por %p231, %p232
    %p234 = scmp.ne.s32.totalorder %s225, %s226
    %p235 = scmp.eq.s32.totalorder %s21, 0
    %p236 = por %p234, %p235
    %p237 = scmp.ne.s32.totalorder %s225, %s226
    %p238 = scmp.eq.s32.totalorder %s22, 1
    %p239 = por %p237, %p238
    %p241 = scmp.ne.s32.totalorder %s226, %s240
    %p242 = scmp.eq.s32.totalorder %s22, 0
    %p243 = por %p241, %p242
    %s244 = ssub.s32 %s16, %s23
    %p245 = scmp.eq.s32.totalorder %s244, 0
    %s247 = sadd.s32 %s246, 1
    %s248 = scalar_select %p245, %s246, %s247
    %p251 = pneg %p245
    %p252 = scmp.eq.s32.totalorder %s16, 1
    %p253 = por %p251, %p252
    %p254 = scmp.ne.s32.totalorder %s246, %s249
    %p255 = scmp.eq.s32.totalorder %s16, 0
    %p256 = por %p254, %p255
    %p257 = scmp.ne.s32.totalorder %s246, %s249
    %p258 = scmp.eq.s32.totalorder %s21, 1
    %p259 = por %p257, %p258
    %p260 = scmp.ne.s32.totalorder %s249, %s250
    %p261 = scmp.eq.s32.totalorder %s21, 0
    %p262 = por %p260, %p261
    %p263 = scmp.ne.s32.totalorder %s249, %s250
    %p264 = scmp.eq.s32.totalorder %s22, 1
    %p265 = por %p263, %p264
    %p267 = scmp.ne.s32.totalorder %s250, %s266
    %p268 = scmp.eq.s32.totalorder %s22, 0
    %p269 = por %p267, %p268
    %p270 = scmp.le.s32.totalorder 1, %s16
    %p271 = scmp.lt.s32.totalorder %s16, 3
    %p272 = pnand %p270, %p271
    %p273 = pneg %p272
    // Predicated region
    $region9: #{bomcnn_forward.1} parent=5 // pred_check
      _
    $region10: #{bomcnn_forward.1} parent=5 // pred_check_branch
      %275 = sbr.rel (%p272) target = $region12
    $region11: #{bomcnn_forward.1} parent=5 // pred_region
      %s276 = ssub.s32 %s16, 1
      // Predicated region
      $region13: #{bomcnn_forward.1} parent=11 // pred_check
        %p277 = pneg %p89
      $region14: #{bomcnn_forward.1} parent=11 // pred_check_branch
        %279 = sbr.rel (%p277) target = $region16
      $region15: #{bomcnn_forward.1} parent=11 // pred_region
        _
      $region16: #{bomcnn_forward.1} parent=11 // pred_fallthru
        _
      // Predicated region
      $region17: #{bomcnn_forward.1} parent=11 // pred_check
        %p280 = pneg %p110
      $region18: #{bomcnn_forward.1} parent=11 // pred_check_branch
        %282 = sbr.rel (%p280) target = $region20
      $region19: #{bomcnn_forward.1} parent=11 // pred_region
        _
      $region20: #{bomcnn_forward.1} parent=11 // pred_fallthru
        _
      // Predicated region
      $region21: #{bomcnn_forward.1} parent=11 // pred_check
        %p283 = pneg %p131
      $region22: #{bomcnn_forward.1} parent=11 // pred_check_branch
        %285 = sbr.rel (%p283) target = $region24
      $region23: #{bomcnn_forward.1} parent=11 // pred_region
        _
      $region24: #{bomcnn_forward.1} parent=11 // pred_fallthru
        _
      // Predicated region
      $region25: #{bomcnn_forward.1} parent=11 // pred_check
        %p286 = pneg %p152
      $region26: #{bomcnn_forward.1} parent=11 // pred_check_branch
        %288 = sbr.rel (%p286) target = $region28
      $region27: #{bomcnn_forward.1} parent=11 // pred_region
        _
      $region28: #{bomcnn_forward.1} parent=11 // pred_fallthru
        _
      // Predicated region
      $region29: #{bomcnn_forward.1} parent=11 // pred_check
        %p289 = pneg %p173
      $region30: #{bomcnn_forward.1} parent=11 // pred_check_branch
        %291 = sbr.rel (%p289) target = $region32
      $region31: #{bomcnn_forward.1} parent=11 // pred_region
        _
      $region32: #{bomcnn_forward.1} parent=11 // pred_fallthru
        _
      // Predicated region
      $region33: #{bomcnn_forward.1} parent=11 // pred_check
        %p292 = pneg %p194
      $region34: #{bomcnn_forward.1} parent=11 // pred_check_branch
        %294 = sbr.rel (%p292) target = $region36
      $region35: #{bomcnn_forward.1} parent=11 // pred_region
        _
      $region36: #{bomcnn_forward.1} parent=11 // pred_fallthru
        _
      // Predicated region
      $region37: #{bomcnn_forward.1} parent=11 // pred_check
        %p295 = pneg %p215
      $region38: #{bomcnn_forward.1} parent=11 // pred_check_branch
        %297 = sbr.rel (%p295) target = $region40
      $region39: #{bomcnn_forward.1} parent=11 // pred_region
        _
      $region40: #{bomcnn_forward.1} parent=11 // pred_fallthru
        _
      // Predicated region
      $region41: #{bomcnn_forward.1} parent=11 // pred_check
        %p298 = pneg %p236
      $region42: #{bomcnn_forward.1} parent=11 // pred_check_branch
        %300 = sbr.rel (%p298) target = $region44
      $region43: #{bomcnn_forward.1} parent=11 // pred_region
        _
      $region44: #{bomcnn_forward.1} parent=11 // pred_fallthru
        _
    $region12: #{bomcnn_forward.1} parent=5 // pred_fallthru
      _
    %p301 = scmp.lt.s32.totalorder %s16, 2
    // Predicated region
    $region45: #{bomcnn_forward.1} parent=5 // pred_check
      %p302 = pneg %p301
    $region46: #{bomcnn_forward.1} parent=5 // pred_check_branch
      %304 = sbr.rel (%p302) target = $region48
    $region47: #{bomcnn_forward.1} parent=5 // pred_region
      // Predicated region
      $region49: #{bomcnn_forward.1} parent=47 // pred_check
        %p305 = pneg %p36
      $region50: #{bomcnn_forward.1} parent=47 // pred_check_branch
        %307 = sbr.rel (%p305) target = $region52
      $region51: #{bomcnn_forward.1} parent=47 // pred_region
        %s308 = smul.u32 2, %s16
        %p309 = scmp.lt.s32.totalorder %s308, 3
        %s310 = scalar_select %p309, %s308, 3
        %s311 = smul.addr %s310, 8
        %s312 = scalar_lea.vmem %s0, %s311
        %s313 = smul.u32 2, %s16
      $region52: #{bomcnn_forward.1} parent=47 // pred_fallthru
        _
      // Predicated region
      $region53: #{bomcnn_forward.1} parent=47 // pred_check
        %p314 = pneg %p62
      $region54: #{bomcnn_forward.1} parent=47 // pred_check_branch
        %316 = sbr.rel (%p314) target = $region56
      $region55: #{bomcnn_forward.1} parent=47 // pred_region
        %s317 = smul.u32 2, %s16
        %p318 = scmp.lt.s32.totalorder %s317, 3
        %s319 = scalar_select %p318, %s317, 3
        %s320 = smul.addr %s319, 4
        %s321 = scalar_lea.vmem %s1, %s320
        %s322 = smul.u32 2, %s16
      $region56: #{bomcnn_forward.1} parent=47 // pred_fallthru
        _
    $region48: #{bomcnn_forward.1} parent=5 // pred_fallthru
      _
    %p323 = scmp.le.s32.totalorder 1, %s16
    %p324 = scmp.lt.s32.totalorder %s16, 3
    %p325 = pnand %p323, %p324
    %p326 = pneg %p325
    // Predicated region
    $region57: #{bomcnn_forward.1} parent=5 // pred_check
      _
    $region58: #{bomcnn_forward.1} parent=5 // pred_check_branch
      %328 = sbr.rel (%p325) target = $region60
    $region59: #{bomcnn_forward.1} parent=5 // pred_region
      %s329 = ssub.s32 %s16, 1
      %s330 = smul.u32 2, %s21
      %p331 = scmp.lt.s32.totalorder %s330, 3
      %s332 = scalar_select %p331, %s330, 3
      %s333 = smul.addr %s332, 8
      %s334 = scalar_lea.vmem %s0, %s333
      %p335 = pneg %p42
      %p336 = pneg %p39
      %s337 = smul.u32 2, %s21
      %p338 = scmp.lt.s32.totalorder %s337, 3
      %s339 = scalar_select %p338, %s337, 3
      %s340 = smul.addr %s339, 4
      %s341 = scalar_lea.vmem %s1, %s340
      %p342 = pneg %p68
      %p343 = pneg %p65
      %p344 = pneg %p89
      %p345 = pneg %p86
      %p346 = pneg %p110
      %p347 = pneg %p107
      %p348 = pneg %p131
      %p349 = pneg %p128
      %p350 = pneg %p152
      %p351 = pneg %p149
      %p352 = pneg %p173
      %p353 = pneg %p170
      %p354 = pneg %p194
      %p355 = pneg %p191
      %p356 = pneg %p215
      %p357 = pneg %p212
      %p358 = pneg %p236
      %p359 = pneg %p233
      %p360 = pneg %p262
      %p361 = pneg %p259
      %s362 = smul.u32 2, %s21
      %p363 = scmp.lt.s32.totalorder %s362, 3
      %s364 = scalar_select %p363, %s362, 3
      %s365 = smul.addr %s364, 8
      %s366 = scalar_lea.vmem %s10, %s365
      %s367 = smul.u32 2, %s21
      %p368 = scmp.lt.s32.totalorder %s367, 3
      %s369 = scalar_select %p368, %s367, 3
      %s370 = smul.addr %s369, 8
      %s371 = scalar_lea.vmem %s0, %s370
      %s372 = smul.u32 2, %s21
      %s373 = smul.u32 2, %s21
      %p374 = scmp.lt.s32.totalorder %s373, 3
      %s375 = scalar_select %p374, %s373, 3
      %s376 = smul.addr %s375, 4
      %s377 = scalar_lea.vmem %s1, %s376
      %s378 = smul.u32 2, %s21
      %s379 = smul.u32 2, %s21
      %p380 = scmp.lt.s32.totalorder %s379, 3
      %s381 = scalar_select %p380, %s379, 3
      %s382 = smul.addr %s381, 8
      %s383 = scalar_lea.vmem %s10, %s382
      %s384 = smul.u32 2, %s21
      %v386 = vld [vmem:[%s371] sm:$0xff]
      %v387 = vld [vmem:[%s371 + $0x8] sm:$0xff]
      %v388 = vlaneseq
      %v389 = vshrl.u32 %v388, 7
      %v390 = vsub.s32 0, %v389
      %v391 = vrot.slane %v386, %v390
      %393 = vbcast.lane.b32.xlu0 %v391, 256
      %v394 = vpop.permute.xlu0 %393
      %s396 = sor.u32 256, 8
      %397 = vbcast.lane.b32.xlu0 %v391, %s396
      %v398 = vpop.permute.xlu0 %397
      %v399 = vlaneseq
      %v400 = vshrl.u32 %v399, 7
      %v401 = vsub.s32 1, %v400
      %v402 = vrot.slane %v386, %v401
      %404 = vbcast.lane.b32.xlu0 %v402, 256
      %v405 = vpop.permute.xlu0 %404
      %s407 = sor.u32 256, 8
      %408 = vbcast.lane.b32.xlu0 %v402, %s407
      %v409 = vpop.permute.xlu0 %408
      %v410 = vlaneseq
      %v411 = vshrl.u32 %v410, 7
      %v412 = vsub.s32 2, %v411
      %v413 = vrot.slane %v386, %v412
      %415 = vbcast.lane.b32.xlu0 %v413, 256
      %v416 = vpop.permute.xlu0 %415
      %s418 = sor.u32 256, 8
      %419 = vbcast.lane.b32.xlu0 %v413, %s418
      %v420 = vpop.permute.xlu0 %419
      %v421 = vlaneseq
      %v422 = vshrl.u32 %v421, 7
      %v423 = vsub.s32 3, %v422
      %v424 = vrot.slane %v386, %v423
      %426 = vbcast.lane.b32.xlu0 %v424, 256
      %v427 = vpop.permute.xlu0 %426
      %s429 = sor.u32 256, 8
      %430 = vbcast.lane.b32.xlu0 %v424, %s429
      %v431 = vpop.permute.xlu0 %430
      %v432 = vlaneseq
      %v433 = vshrl.u32 %v432, 7
      %v434 = vsub.s32 4, %v433
      %v435 = vrot.slane %v386, %v434
      %437 = vbcast.lane.b32.xlu0 %v435, 256
      %v438 = vpop.permute.xlu0 %437
      %s440 = sor.u32 256, 8
      %441 = vbcast.lane.b32.xlu0 %v435, %s440
      %v442 = vpop.permute.xlu0 %441
      %v443 = vlaneseq
      %v444 = vshrl.u32 %v443, 7
      %v445 = vsub.s32 5, %v444
      %v446 = vrot.slane %v386, %v445
      %448 = vbcast.lane.b32.xlu0 %v446, 256
      %v449 = vpop.permute.xlu0 %448
      %s451 = sor.u32 256, 8
      %452 = vbcast.lane.b32.xlu0 %v446, %s451
      %v453 = vpop.permute.xlu0 %452
      %v454 = vlaneseq
      %v455 = vshrl.u32 %v454, 7
      %v456 = vsub.s32 6, %v455
      %v457 = vrot.slane %v386, %v456
      %459 = vbcast.lane.b32.xlu0 %v457, 256
      %v460 = vpop.permute.xlu0 %459
      %s462 = sor.u32 256, 8
      %463 = vbcast.lane.b32.xlu0 %v457, %s462
      %v464 = vpop.permute.xlu0 %463
      %v465 = vlaneseq
      %v466 = vshrl.u32 %v465, 7
      %v467 = vsub.s32 7, %v466
      %v468 = vrot.slane %v386, %v467
      %470 = vbcast.lane.b32.xlu0 %v468, 256
      %v471 = vpop.permute.xlu0 %470
      %s473 = sor.u32 256, 8
      %474 = vbcast.lane.b32.xlu0 %v468, %s473
      %v475 = vpop.permute.xlu0 %474
      %v476 = vlaneseq
      %v477 = vshrl.u32 %v476, 7
      %v478 = vsub.s32 0, %v477
      %v479 = vrot.slane %v387, %v478
      %481 = vbcast.lane.b32.xlu0 %v479, 256
      %v482 = vpop.permute.xlu0 %481
      %s484 = sor.u32 256, 8
      %485 = vbcast.lane.b32.xlu0 %v479, %s484
      %v486 = vpop.permute.xlu0 %485
      %v487 = vlaneseq
      %v488 = vshrl.u32 %v487, 7
      %v489 = vsub.s32 1, %v488
      %v490 = vrot.slane %v387, %v489
      %492 = vbcast.lane.b32.xlu0 %v490, 256
      %v493 = vpop.permute.xlu0 %492
      %s495 = sor.u32 256, 8
      %496 = vbcast.lane.b32.xlu0 %v490, %s495
      %v497 = vpop.permute.xlu0 %496
      %v498 = vlaneseq
      %v499 = vshrl.u32 %v498, 7
      %v500 = vsub.s32 2, %v499
      %v501 = vrot.slane %v387, %v500
      %503 = vbcast.lane.b32.xlu0 %v501, 256
      %v504 = vpop.permute.xlu0 %503
      %s506 = sor.u32 256, 8
      %507 = vbcast.lane.b32.xlu0 %v501, %s506
      %v508 = vpop.permute.xlu0 %507
      %v509 = vlaneseq
      %v510 = vshrl.u32 %v509, 7
      %v511 = vsub.s32 3, %v510
      %v512 = vrot.slane %v387, %v511
      %514 = vbcast.lane.b32.xlu0 %v512, 256
      %v515 = vpop.permute.xlu0 %514
      %s517 = sor.u32 256, 8
      %518 = vbcast.lane.b32.xlu0 %v512, %s517
      %v519 = vpop.permute.xlu0 %518
      %v520 = vlaneseq
      %v521 = vshrl.u32 %v520, 7
      %v522 = vsub.s32 4, %v521
      %v523 = vrot.slane %v387, %v522
      %525 = vbcast.lane.b32.xlu0 %v523, 256
      %v526 = vpop.permute.xlu0 %525
      %s528 = sor.u32 256, 8
      %529 = vbcast.lane.b32.xlu0 %v523, %s528
      %v530 = vpop.permute.xlu0 %529
      %v531 = vlaneseq
      %v532 = vshrl.u32 %v531, 7
      %v533 = vsub.s32 5, %v532
      %v534 = vrot.slane %v387, %v533
      %536 = vbcast.lane.b32.xlu0 %v534, 256
      %v537 = vpop.permute.xlu0 %536
      %s539 = sor.u32 256, 8
      %540 = vbcast.lane.b32.xlu0 %v534, %s539
      %v541 = vpop.permute.xlu0 %540
      %v542 = vlaneseq
      %v543 = vshrl.u32 %v542, 7
      %v544 = vsub.s32 6, %v543
      %v545 = vrot.slane %v387, %v544
      %547 = vbcast.lane.b32.xlu0 %v545, 256
      %v548 = vpop.permute.xlu0 %547
      %s550 = sor.u32 256, 8
      %551 = vbcast.lane.b32.xlu0 %v545, %s550
      %v552 = vpop.permute.xlu0 %551
      %v553 = vlaneseq
      %v554 = vshrl.u32 %v553, 7
      %v555 = vsub.s32 7, %v554
      %v556 = vrot.slane %v387, %v555
      %558 = vbcast.lane.b32.xlu0 %v556, 256
      %v559 = vpop.permute.xlu0 %558
      %s561 = sor.u32 256, 8
      %562 = vbcast.lane.b32.xlu0 %v556, %s561
      %v563 = vpop.permute.xlu0 %562
      %v564 = vlaneseq
      %v565 = vand.u32 %v564, 127
      %vm566 = vcmp.eq.s32.totalorder %v394, %v565
      %vm567 = vcmp.eq.s32.totalorder %v398, %v565
      %vm568 = vcmp.eq.s32.totalorder %v405, %v565
      %vm569 = vcmp.eq.s32.totalorder %v409, %v565
      %vm570 = vcmp.eq.s32.totalorder %v416, %v565
      %vm571 = vcmp.eq.s32.totalorder %v420, %v565
      %vm572 = vcmp.eq.s32.totalorder %v427, %v565
      %vm573 = vcmp.eq.s32.totalorder %v431, %v565
      %vm574 = vcmp.eq.s32.totalorder %v438, %v565
      %vm575 = vcmp.eq.s32.totalorder %v442, %v565
      %vm576 = vcmp.eq.s32.totalorder %v449, %v565
      %vm577 = vcmp.eq.s32.totalorder %v453, %v565
      %vm578 = vcmp.eq.s32.totalorder %v460, %v565
      %vm579 = vcmp.eq.s32.totalorder %v464, %v565
      %vm580 = vcmp.eq.s32.totalorder %v471, %v565
      %vm581 = vcmp.eq.s32.totalorder %v475, %v565
      %vm582 = vcmp.eq.s32.totalorder %v482, %v565
      %vm583 = vcmp.eq.s32.totalorder %v486, %v565
      %vm584 = vcmp.eq.s32.totalorder %v493, %v565
      %vm585 = vcmp.eq.s32.totalorder %v497, %v565
      %vm586 = vcmp.eq.s32.totalorder %v504, %v565
      %vm587 = vcmp.eq.s32.totalorder %v508, %v565
      %vm588 = vcmp.eq.s32.totalorder %v515, %v565
      %vm589 = vcmp.eq.s32.totalorder %v519, %v565
      %vm590 = vcmp.eq.s32.totalorder %v526, %v565
      %vm591 = vcmp.eq.s32.totalorder %v530, %v565
      %vm592 = vcmp.eq.s32.totalorder %v537, %v565
      %vm593 = vcmp.eq.s32.totalorder %v541, %v565
      %vm594 = vcmp.eq.s32.totalorder %v548, %v565
      %vm595 = vcmp.eq.s32.totalorder %v552, %v565
      %vm596 = vcmp.eq.s32.totalorder %v559, %v565
      %vm597 = vcmp.eq.s32.totalorder %v563, %v565
      %v598 = vsel %vm566, 1, 0
      %v599 = vsel %vm567, 1, 0
      %v600 = vsel %vm568, 1, 0
      %v601 = vsel %vm569, 1, 0
      %v602 = vsel %vm570, 1, 0
      %v603 = vsel %vm571, 1, 0
      %v604 = vsel %vm572, 1, 0
      %v605 = vsel %vm573, 1, 0
      %v606 = vsel %vm574, 1, 0
      %v607 = vsel %vm575, 1, 0
      %v608 = vsel %vm576, 1, 0
      %v609 = vsel %vm577, 1, 0
      %v610 = vsel %vm578, 1, 0
      %v611 = vsel %vm579, 1, 0
      %v612 = vsel %vm580, 1, 0
      %v613 = vsel %vm581, 1, 0
      %v614 = vsel %vm582, 1, 0
      %v615 = vsel %vm583, 1, 0
      %v616 = vsel %vm584, 1, 0
      %v617 = vsel %vm585, 1, 0
      %v618 = vsel %vm586, 1, 0
      %v619 = vsel %vm587, 1, 0
      %v620 = vsel %vm588, 1, 0
      %v621 = vsel %vm589, 1, 0
      %v622 = vsel %vm590, 1, 0
      %v623 = vsel %vm591, 1, 0
      %v624 = vsel %vm592, 1, 0
      %v625 = vsel %vm593, 1, 0
      %v626 = vsel %vm594, 1, 0
      %v627 = vsel %vm595, 1, 0
      %v628 = vsel %vm596, 1, 0
      %v629 = vsel %vm597, 1, 0
      %v630 = vcvt.s32.f32 %v598
      %v631 = vcvt.s32.f32 %v599
      %v632 = vcvt.s32.f32 %v600
      %v633 = vcvt.s32.f32 %v601
      %v634 = vcvt.s32.f32 %v602
      %v635 = vcvt.s32.f32 %v603
      %v636 = vcvt.s32.f32 %v604
      %v637 = vcvt.s32.f32 %v605
      %v638 = vcvt.s32.f32 %v606
      %v639 = vcvt.s32.f32 %v607
      %v640 = vcvt.s32.f32 %v608
      %v641 = vcvt.s32.f32 %v609
      %v642 = vcvt.s32.f32 %v610
      %v643 = vcvt.s32.f32 %v611
      %v644 = vcvt.s32.f32 %v612
      %v645 = vcvt.s32.f32 %v613
      %v646 = vcvt.s32.f32 %v614
      %v647 = vcvt.s32.f32 %v615
      %v648 = vcvt.s32.f32 %v616
      %v649 = vcvt.s32.f32 %v617
      %v650 = vcvt.s32.f32 %v618
      %v651 = vcvt.s32.f32 %v619
      %v652 = vcvt.s32.f32 %v620
      %v653 = vcvt.s32.f32 %v621
      %v654 = vcvt.s32.f32 %v622
      %v655 = vcvt.s32.f32 %v623
      %v656 = vcvt.s32.f32 %v624
      %v657 = vcvt.s32.f32 %v625
      %v658 = vcvt.s32.f32 %v626
      %v659 = vcvt.s32.f32 %v627
      %v660 = vcvt.s32.f32 %v628
      %v661 = vcvt.s32.f32 %v629
      %v662 = vpack.c.bf16 %v631, %v630
      %v663 = vpack.c.bf16 %v633, %v632
      %v664 = vpack.c.bf16 %v635, %v634
      %v665 = vpack.c.bf16 %v637, %v636
      %v666 = vpack.c.bf16 %v639, %v638
      %v667 = vpack.c.bf16 %v641, %v640
      %v668 = vpack.c.bf16 %v643, %v642
      %v669 = vpack.c.bf16 %v645, %v644
      %v670 = vpack.c.bf16 %v647, %v646
      %v671 = vpack.c.bf16 %v649, %v648
      %v672 = vpack.c.bf16 %v651, %v650
      %v673 = vpack.c.bf16 %v653, %v652
      %v674 = vpack.c.bf16 %v655, %v654
      %v675 = vpack.c.bf16 %v657, %v656
      %v676 = vpack.c.bf16 %v659, %v658
      %v677 = vpack.c.bf16 %v661, %v660
      %v678 = vld [vmem:[%s2] sm:$0xf]
      %v679 = vld [vmem:[%s2 + $0x4] sm:$0xf]
      %v680 = vld [vmem:[%s2 + $0x8] sm:$0xf]
      %v681 = vld [vmem:[%s2 + $0xc] sm:$0xf]
      %v682 = vld [vmem:[%s2 + $0x10] sm:$0xf]
      %v683 = vld [vmem:[%s2 + $0x14] sm:$0xf]
      %v684 = vld [vmem:[%s2 + $0x18] sm:$0xf]
      %v685 = vld [vmem:[%s2 + $0x1c] sm:$0xf]
      %v686 = vld [vmem:[%s2 + $0x20] sm:$0xf]
      %v687 = vld [vmem:[%s2 + $0x24] sm:$0xf]
      %v688 = vld [vmem:[%s2 + $0x28] sm:$0xf]
      %v689 = vld [vmem:[%s2 + $0x2c] sm:$0xf]
      %v690 = vld [vmem:[%s2 + $0x30] sm:$0xf]
      %v691 = vld [vmem:[%s2 + $0x34] sm:$0xf]
      %v692 = vld [vmem:[%s2 + $0x38] sm:$0xf]
      %v693 = vld [vmem:[%s2 + $0x3c] sm:$0xf]
      %v710 = vunpack.c.l.b16 %v678
      %v711 = vunpack.c.l.b16 %v679
      %v712 = vunpack.c.l.b16 %v680
      %v713 = vunpack.c.l.b16 %v681
      %v714 = vunpack.c.l.b16 %v682
      %v715 = vunpack.c.l.b16 %v683
      %v716 = vunpack.c.l.b16 %v684
      %v717 = vunpack.c.l.b16 %v685
      %v718 = vunpack.c.l.b16 %v686
      %v719 = vunpack.c.l.b16 %v687
      %v720 = vunpack.c.l.b16 %v688
      %v721 = vunpack.c.l.b16 %v689
      %v722 = vunpack.c.l.b16 %v690
      %v723 = vunpack.c.l.b16 %v691
      %v724 = vunpack.c.l.b16 %v692
      %v725 = vunpack.c.l.b16 %v693
      %v726 = vpack.c.b16 %v711, %v710
      %v727 = vpack.c.b16 %v713, %v712
      %v728 = vpack.c.b16 %v715, %v714
      %v729 = vpack.c.b16 %v717, %v716
      %v730 = vpack.c.b16 %v719, %v718
      %v731 = vpack.c.b16 %v721, %v720
      %v732 = vpack.c.b16 %v723, %v722
      %v733 = vpack.c.b16 %v725, %v724
      %742 = vmatprep.subr.bf16.mxu0 0
      %743 = vmatpush1.bf16.msra.mxu0 %v733
      %744 = vmatprep.subr.bf16.mxu0 0
      %745 = vmatpush1.bf16.msra.mxu0 %v732
      %746 = vmatprep.subr.bf16.mxu0 0
      %747 = vmatpush1.bf16.msra.mxu0 %v731
      %748 = vmatprep.subr.bf16.mxu0 0
      %749 = vmatpush1.bf16.msra.mxu0 %v730
      %750 = vmatprep.subr.bf16.mxu0 0
      %751 = vmatpush1.bf16.msra.mxu0 %v729
      %752 = vmatprep.subr.bf16.mxu0 0
      %753 = vmatpush1.bf16.msra.mxu0 %v728
      %754 = vmatprep.subr.bf16.mxu0 0
      %755 = vmatpush1.bf16.msra.mxu0 %v727
      %756 = vmatprep.subr.bf16.mxu0 0
      %757 = vmatpush1.bf16.msra.mxu0 %v726
      %758 = vmatprep.subr.bf16.mxu0 0
      %759 = vmatpush2.bf16.msra.mxu0 0
      %760 = vmatprep.subr.bf16.mxu0 0
      %761 = vmatpush2.bf16.msra.mxu0 0
      %762 = vmatprep.subr.bf16.mxu0 0
      %763 = vmatpush2.bf16.msra.mxu0 0
      %764 = vmatprep.subr.bf16.mxu0 0
      %765 = vmatpush2.bf16.msra.mxu0 0
      %766 = vmatprep.subr.bf16.mxu0 0
      %767 = vmatpush2.bf16.msra.mxu0 0
      %768 = vmatprep.subr.bf16.mxu0 0
      %769 = vmatpush2.bf16.msra.mxu0 0
      %770 = vmatprep.subr.bf16.mxu0 0
      %771 = vmatpush2.bf16.msra.mxu0 0
      %772 = vmatprep.subr.bf16.mxu0 0
      %773 = vmatpush2.bf16.msra.mxu0 0
      %774 = vmatprep.mubr.bf16.mxu0 0
      %775 = vmatmul.mubr.bf16.gmra.mxu0 %v662
      %v776 = vpop.f32.mrf.mxu0
      %v777 = vadd.f32 0.0, %v776
      %v778 = vpop.f32.mrf.mxu0
      %v779 = vpop.f32.mrf.mxu0
      %v780 = vadd.f32 0.0, %v779
      %v781 = vpop.f32.mrf.mxu0
      %782 = vmatprep.mubr.bf16.mxu0 0
      %783 = vmatmul.mubr.bf16.gmra.mxu0 %v663
      %v784 = vpop.f32.mrf.mxu0
      %v785 = vadd.f32 0.0, %v784
      %v786 = vpop.f32.mrf.mxu0
      %v787 = vpop.f32.mrf.mxu0
      %v788 = vadd.f32 0.0, %v787
      %v789 = vpop.f32.mrf.mxu0
      %790 = vmatprep.mubr.bf16.mxu0 0
      %791 = vmatmul.mubr.bf16.gmra.mxu0 %v664
      %v792 = vpop.f32.mrf.mxu0
      %v793 = vadd.f32 0.0, %v792
      %v794 = vpop.f32.mrf.mxu0
      %v795 = vpop.f32.mrf.mxu0
      %v796 = vadd.f32 0.0, %v795
      %v797 = vpop.f32.mrf.mxu0
      %798 = vmatprep.mubr.bf16.mxu0 0
      %799 = vmatmul.mubr.bf16.gmra.mxu0 %v665
      %v800 = vpop.f32.mrf.mxu0
      %v801 = vadd.f32 0.0, %v800
      %v802 = vpop.f32.mrf.mxu0
      %v803 = vpop.f32.mrf.mxu0
      %v804 = vadd.f32 0.0, %v803
      %v805 = vpop.f32.mrf.mxu0
      %806 = vmatprep.mubr.bf16.mxu0 0
      %807 = vmatmul.mubr.bf16.gmra.mxu0 %v666
      %v808 = vpop.f32.mrf.mxu0
      %v809 = vadd.f32 0.0, %v808
      %v810 = vpop.f32.mrf.mxu0
      %v811 = vpop.f32.mrf.mxu0
      %v812 = vadd.f32 0.0, %v811
      %v813 = vpop.f32.mrf.mxu0
      %814 = vmatprep.mubr.bf16.mxu0 0
      %815 = vmatmul.mubr.bf16.gmra.mxu0 %v667
      %v816 = vpop.f32.mrf.mxu0
      %v817 = vadd.f32 0.0, %v816
      %v818 = vpop.f32.mrf.mxu0
      %v819 = vpop.f32.mrf.mxu0
      %v820 = vadd.f32 0.0, %v819
      %v821 = vpop.f32.mrf.mxu0
      %822 = vmatprep.mubr.bf16.mxu0 0
      %823 = vmatmul.mubr.bf16.gmra.mxu0 %v668
      %v824 = vpop.f32.mrf.mxu0
      %v825 = vadd.f32 0.0, %v824
      %v826 = vpop.f32.mrf.mxu0
      %v827 = vpop.f32.mrf.mxu0
      %v828 = vadd.f32 0.0, %v827
      %v829 = vpop.f32.mrf.mxu0
      %830 = vmatprep.mubr.bf16.mxu0 0
      %831 = vmatmul.mubr.bf16.gmra.mxu0 %v669
      %v832 = vpop.f32.mrf.mxu0
      %v833 = vadd.f32 0.0, %v832
      %v834 = vpop.f32.mrf.mxu0
      %v835 = vpop.f32.mrf.mxu0
      %v836 = vadd.f32 0.0, %v835
      %v837 = vpop.f32.mrf.mxu0
      %838 = vmatprep.mubr.bf16.mxu0 0
      %839 = vmatmul.mubr.bf16.gmra.mxu0 %v670
      %v840 = vpop.f32.mrf.mxu0
      %v841 = vadd.f32 0.0, %v840
      %v842 = vpop.f32.mrf.mxu0
      %v843 = vpop.f32.mrf.mxu0
      %v844 = vadd.f32 0.0, %v843
      %v845 = vpop.f32.mrf.mxu0
      %846 = vmatprep.mubr.bf16.mxu0 0
      %847 = vmatmul.mubr.bf16.gmra.mxu0 %v671
      %v848 = vpop.f32.mrf.mxu0
      %v849 = vadd.f32 0.0, %v848
      %v850 = vpop.f32.mrf.mxu0
      %v851 = vpop.f32.mrf.mxu0
      %v852 = vadd.f32 0.0, %v851
      %v853 = vpop.f32.mrf.mxu0
      %854 = vmatprep.mubr.bf16.mxu0 0
      %855 = vmatmul.mubr.bf16.gmra.mxu0 %v672
      %v856 = vpop.f32.mrf.mxu0
      %v857 = vadd.f32 0.0, %v856
      %v858 = vpop.f32.mrf.mxu0
      %v859 = vpop.f32.mrf.mxu0
      %v860 = vadd.f32 0.0, %v859
      %v861 = vpop.f32.mrf.mxu0
      %862 = vmatprep.mubr.bf16.mxu0 0
      %863 = vmatmul.mubr.bf16.gmra.mxu0 %v673
      %v864 = vpop.f32.mrf.mxu0
      %v865 = vadd.f32 0.0, %v864
      %v866 = vpop.f32.mrf.mxu0
      %v867 = vpop.f32.mrf.mxu0
      %v868 = vadd.f32 0.0, %v867
      %v869 = vpop.f32.mrf.mxu0
      %870 = vmatprep.mubr.bf16.mxu0 0
      %871 = vmatmul.mubr.bf16.gmra.mxu0 %v674
      %v872 = vpop.f32.mrf.mxu0
      %v873 = vadd.f32 0.0, %v872
      %v874 = vpop.f32.mrf.mxu0
      %v875 = vpop.f32.mrf.mxu0
      %v876 = vadd.f32 0.0, %v875
      %v877 = vpop.f32.mrf.mxu0
      %878 = vmatprep.mubr.bf16.mxu0 0
      %879 = vmatmul.mubr.bf16.gmra.mxu0 %v675
      %v880 = vpop.f32.mrf.mxu0
      %v881 = vadd.f32 0.0, %v880
      %v882 = vpop.f32.mrf.mxu0
      %v883 = vpop.f32.mrf.mxu0
      %v884 = vadd.f32 0.0, %v883
      %v885 = vpop.f32.mrf.mxu0
      %886 = vmatprep.mubr.bf16.mxu0 0
      %887 = vmatmul.mubr.bf16.gmra.mxu0 %v676
      %v888 = vpop.f32.mrf.mxu0
      %v889 = vadd.f32 0.0, %v888
      %v890 = vpop.f32.mrf.mxu0
      %v891 = vpop.f32.mrf.mxu0
      %v892 = vadd.f32 0.0, %v891
      %v893 = vpop.f32.mrf.mxu0
      %894 = vmatprep.mubr.bf16.mxu0 0
      %895 = vmatmul.mubr.bf16.gmra.mxu0 %v677
      %v896 = vpop.f32.mrf.mxu0
      %v897 = vadd.f32 0.0, %v896
      %v898 = vpop.f32.mrf.mxu0
      %v899 = vpop.f32.mrf.mxu0
      %v900 = vadd.f32 0.0, %v899
      %v901 = vpop.f32.mrf.mxu0
      %902 = vdwg.mxu0
      %v903 = vpack.c.bf16 %v780, %v777
      %v904 = vpack.c.bf16 %v788, %v785
      %v905 = vpack.c.bf16 %v796, %v793
      %v906 = vpack.c.bf16 %v804, %v801
      %v907 = vpack.c.bf16 %v812, %v809
      %v908 = vpack.c.bf16 %v820, %v817
      %v909 = vpack.c.bf16 %v828, %v825
      %v910 = vpack.c.bf16 %v836, %v833
      %v911 = vpack.c.bf16 %v844, %v841
      %v912 = vpack.c.bf16 %v852, %v849
      %v913 = vpack.c.bf16 %v860, %v857
      %v914 = vpack.c.bf16 %v868, %v865
      %v915 = vpack.c.bf16 %v876, %v873
      %v916 = vpack.c.bf16 %v884, %v881
      %v917 = vpack.c.bf16 %v892, %v889
      %v918 = vpack.c.bf16 %v900, %v897
      %v919 = vld [vmem:[%s3] sm:$0xff]
      %v920 = vld [vmem:[%s3 + $0x8] sm:$0xf]
      %v921 = vld [vmem:[%s3 + $0xc] sm:$0xff]
      %v922 = vld [vmem:[%s3 + $0x14] sm:$0xf]
      %v923 = vld [vmem:[%s3 + $0x18] sm:$0xff]
      %v924 = vld [vmem:[%s3 + $0x20] sm:$0xf]
      %v925 = vld [vmem:[%s3 + $0x24] sm:$0xff]
      %v926 = vld [vmem:[%s3 + $0x2c] sm:$0xf]
      %v927 = vld [vmem:[%s3 + $0x30] sm:$0xff]
      %v928 = vld [vmem:[%s3 + $0x38] sm:$0xf]
      %v929 = vld [vmem:[%s3 + $0x3c] sm:$0xff]
      %v930 = vld [vmem:[%s3 + $0x44] sm:$0xf]
      %v931 = vld [vmem:[%s3 + $0x48] sm:$0xff]
      %v932 = vld [vmem:[%s3 + $0x50] sm:$0xf]
      %v933 = vld [vmem:[%s3 + $0x54] sm:$0xff]
      %v934 = vld [vmem:[%s3 + $0x5c] sm:$0xf]
      %v935 = vld [vmem:[%s3 + $0x60] sm:$0xff]
      %v936 = vld [vmem:[%s3 + $0x68] sm:$0xf]
      %v937 = vld [vmem:[%s3 + $0x6c] sm:$0xff]
      %v938 = vld [vmem:[%s3 + $0x74] sm:$0xf]
      %v939 = vld [vmem:[%s3 + $0x78] sm:$0xff]
      %v940 = vld [vmem:[%s3 + $0x80] sm:$0xf]
      %v941 = vld [vmem:[%s3 + $0x84] sm:$0xff]
      %v942 = vld [vmem:[%s3 + $0x8c] sm:$0xf]
      %v943 = vld [vmem:[%s3 + $0x90] sm:$0xff]
      %v944 = vld [vmem:[%s3 + $0x98] sm:$0xf]
      %v945 = vld [vmem:[%s3 + $0x9c] sm:$0xff]
      %v946 = vld [vmem:[%s3 + $0xa4] sm:$0xf]
      %v947 = vld [vmem:[%s3 + $0xa8] sm:$0xff]
      %v948 = vld [vmem:[%s3 + $0xb0] sm:$0xf]
      %v949 = vld [vmem:[%s3 + $0xb4] sm:$0xff]
      %v950 = vld [vmem:[%s3 + $0xbc] sm:$0xf]
      %v983 = vunpack.c.l.b16 %v919
      %v984 = vunpack.c.h.b16 %v919
      %v985 = vunpack.c.l.b16 %v920
      %v986 = vunpack.c.l.b16 %v921
      %v987 = vunpack.c.h.b16 %v921
      %v988 = vunpack.c.l.b16 %v922
      %v989 = vunpack.c.l.b16 %v923
      %v990 = vunpack.c.h.b16 %v923
      %v991 = vunpack.c.l.b16 %v924
      %v992 = vunpack.c.l.b16 %v925
      %v993 = vunpack.c.h.b16 %v925
      %v994 = vunpack.c.l.b16 %v926
      %v995 = vunpack.c.l.b16 %v927
      %v996 = vunpack.c.h.b16 %v927
      %v997 = vunpack.c.l.b16 %v928
      %v998 = vunpack.c.l.b16 %v929
      %v999 = vunpack.c.h.b16 %v929
      %v1000 = vunpack.c.l.b16 %v930
      %v1001 = vunpack.c.l.b16 %v931
      %v1002 = vunpack.c.h.b16 %v931
      %v1003 = vunpack.c.l.b16 %v932
      %v1004 = vunpack.c.l.b16 %v933
      %v1005 = vunpack.c.h.b16 %v933
      %v1006 = vunpack.c.l.b16 %v934
      %v1007 = vunpack.c.l.b16 %v935
      %v1008 = vunpack.c.h.b16 %v935
      %v1009 = vunpack.c.l.b16 %v936
      %v1010 = vunpack.c.l.b16 %v937
      %v1011 = vunpack.c.h.b16 %v937
      %v1012 = vunpack.c.l.b16 %v938
      %v1013 = vunpack.c.l.b16 %v939
      %v1014 = vunpack.c.h.b16 %v939
      %v1015 = vunpack.c.l.b16 %v940
      %v1016 = vunpack.c.l.b16 %v941
      %v1017 = vunpack.c.h.b16 %v941
      %v1018 = vunpack.c.l.b16 %v942
      %v1019 = vunpack.c.l.b16 %v943
      %v1020 = vunpack.c.h.b16 %v943
      %v1021 = vunpack.c.l.b16 %v944
      %v1022 = vunpack.c.l.b16 %v945
      %v1023 = vunpack.c.h.b16 %v945
      %v1024 = vunpack.c.l.b16 %v946
      %v1025 = vunpack.c.l.b16 %v947
      %v1026 = vunpack.c.h.b16 %v947
      %v1027 = vunpack.c.l.b16 %v948
      %v1028 = vunpack.c.l.b16 %v949
      %v1029 = vunpack.c.h.b16 %v949
      %v1030 = vunpack.c.l.b16 %v950
      %v1031 = vpack.c.b16 %v986, %v983
      %v1032 = vpack.c.b16 %v987, %v984
      %v1033 = vpack.c.b16 %v988, %v985
      %v1034 = vpack.c.b16 %v992, %v989
      %v1035 = vpack.c.b16 %v993, %v990
      %v1036 = vpack.c.b16 %v994, %v991
      %v1037 = vpack.c.b16 %v998, %v995
      %v1038 = vpack.c.b16 %v999, %v996
      %v1039 = vpack.c.b16 %v1000, %v997
      %v1040 = vpack.c.b16 %v1004, %v1001
      %v1041 = vpack.c.b16 %v1005, %v1002
      %v1042 = vpack.c.b16 %v1006, %v1003
      %v1043 = vpack.c.b16 %v1010, %v1007
      %v1044 = vpack.c.b16 %v1011, %v1008
      %v1045 = vpack.c.b16 %v1012, %v1009
      %v1046 = vpack.c.b16 %v1016, %v1013
      %v1047 = vpack.c.b16 %v1017, %v1014
      %v1048 = vpack.c.b16 %v1018, %v1015
      %v1049 = vpack.c.b16 %v1022, %v1019
      %v1050 = vpack.c.b16 %v1023, %v1020
      %v1051 = vpack.c.b16 %v1024, %v1021
      %v1052 = vpack.c.b16 %v1028, %v1025
      %v1053 = vpack.c.b16 %v1029, %v1026
      %v1054 = vpack.c.b16 %v1030, %v1027
      %1079 = vmatprep.subr.bf16.mxu0 %v1053
      %1080 = vmatpush1.bf16.msra.mxu0 %v1052
      %1081 = vmatprep.subr.bf16.mxu0 %v1050
      %1082 = vmatpush1.bf16.msra.mxu0 %v1049
      %1083 = vmatprep.subr.bf16.mxu0 %v1047
      %1084 = vmatpush1.bf16.msra.mxu0 %v1046
      %1085 = vmatprep.subr.bf16.mxu0 %v1044
      %1086 = vmatpush1.bf16.msra.mxu0 %v1043
      %1087 = vmatprep.subr.bf16.mxu0 %v1041
      %1088 = vmatpush1.bf16.msra.mxu0 %v1040
      %1089 = vmatprep.subr.bf16.mxu0 %v1038
      %1090 = vmatpush1.bf16.msra.mxu0 %v1037
      %1091 = vmatprep.subr.bf16.mxu0 %v1035
      %1092 = vmatpush1.bf16.msra.mxu0 %v1034
      %1093 = vmatprep.subr.bf16.mxu0 %v1032
      %1094 = vmatpush1.bf16.msra.mxu0 %v1031
      %1095 = vmatprep.subr.bf16.mxu0 0
      %1096 = vmatpush2.bf16.msra.mxu0 0
      %1097 = vmatprep.subr.bf16.mxu0 0
      %1098 = vmatpush2.bf16.msra.mxu0 0
      %1099 = vmatprep.subr.bf16.mxu0 0
      %1100 = vmatpush2.bf16.msra.mxu0 0
      %1101 = vmatprep.subr.bf16.mxu0 0
      %1102 = vmatpush2.bf16.msra.mxu0 0
      %1103 = vmatprep.subr.bf16.mxu0 0
      %1104 = vmatpush2.bf16.msra.mxu0 0
      %1105 = vmatprep.subr.bf16.mxu0 0
      %1106 = vmatpush2.bf16.msra.mxu0 0
      %1107 = vmatprep.subr.bf16.mxu0 0
      %1108 = vmatpush2.bf16.msra.mxu0 0
      %1109 = vmatprep.subr.bf16.mxu0 0
      %1110 = vmatpush2.bf16.msra.mxu0 0
      %1111 = vmatprep.mubr.bf16.mxu0 0
      %1112 = vmatmul.mubr.bf16.gmra.mxu0 %v903
      %v1113 = vpop.f32.mrf.mxu0
      %v1114 = vadd.f32 0.0, %v1113
      %v1115 = vpop.f32.mrf.mxu0
      %v1116 = vadd.f32 0.0, %v1115
      %v1117 = vpop.f32.mrf.mxu0
      %v1118 = vadd.f32 0.0, %v1117
      %v1119 = vpop.f32.mrf.mxu0
      %v1120 = vadd.f32 0.0, %v1119
      %1121 = vmatprep.mubr.bf16.mxu0 0
      %1122 = vmatmul.mubr.bf16.gmra.mxu0 %v904
      %v1123 = vpop.f32.mrf.mxu0
      %v1124 = vadd.f32 0.0, %v1123
      %v1125 = vpop.f32.mrf.mxu0
      %v1126 = vadd.f32 0.0, %v1125
      %v1127 = vpop.f32.mrf.mxu0
      %v1128 = vadd.f32 0.0, %v1127
      %v1129 = vpop.f32.mrf.mxu0
      %v1130 = vadd.f32 0.0, %v1129
      %1131 = vmatprep.mubr.bf16.mxu0 0
      %1132 = vmatmul.mubr.bf16.gmra.mxu0 %v905
      %v1133 = vpop.f32.mrf.mxu0
      %v1134 = vadd.f32 0.0, %v1133
      %v1135 = vpop.f32.mrf.mxu0
      %v1136 = vadd.f32 0.0, %v1135
      %v1137 = vpop.f32.mrf.mxu0
      %v1138 = vadd.f32 0.0, %v1137
      %v1139 = vpop.f32.mrf.mxu0
      %v1140 = vadd.f32 0.0, %v1139
      %1141 = vmatprep.mubr.bf16.mxu0 0
      %1142 = vmatmul.mubr.bf16.gmra.mxu0 %v906
      %v1143 = vpop.f32.mrf.mxu0
      %v1144 = vadd.f32 0.0, %v1143
      %v1145 = vpop.f32.mrf.mxu0
      %v1146 = vadd.f32 0.0, %v1145
      %v1147 = vpop.f32.mrf.mxu0
      %v1148 = vadd.f32 0.0, %v1147
      %v1149 = vpop.f32.mrf.mxu0
      %v1150 = vadd.f32 0.0, %v1149
      %1151 = vmatprep.mubr.bf16.mxu0 0
      %1152 = vmatmul.mubr.bf16.gmra.mxu0 %v907
      %v1153 = vpop.f32.mrf.mxu0
      %v1154 = vadd.f32 0.0, %v1153
      %v1155 = vpop.f32.mrf.mxu0
      %v1156 = vadd.f32 0.0, %v1155
      %v1157 = vpop.f32.mrf.mxu0
      %v1158 = vadd.f32 0.0, %v1157
      %v1159 = vpop.f32.mrf.mxu0
      %v1160 = vadd.f32 0.0, %v1159
      %1161 = vmatprep.mubr.bf16.mxu0 0
      %1162 = vmatmul.mubr.bf16.gmra.mxu0 %v908
      %v1163 = vpop.f32.mrf.mxu0
      %v1164 = vadd.f32 0.0, %v1163
      %v1165 = vpop.f32.mrf.mxu0
      %v1166 = vadd.f32 0.0, %v1165
      %v1167 = vpop.f32.mrf.mxu0
      %v1168 = vadd.f32 0.0, %v1167
      %v1169 = vpop.f32.mrf.mxu0
      %v1170 = vadd.f32 0.0, %v1169
      %1171 = vmatprep.mubr.bf16.mxu0 0
      %1172 = vmatmul.mubr.bf16.gmra.mxu0 %v909
      %v1173 = vpop.f32.mrf.mxu0
      %v1174 = vadd.f32 0.0, %v1173
      %v1175 = vpop.f32.mrf.mxu0
      %v1176 = vadd.f32 0.0, %v1175
      %v1177 = vpop.f32.mrf.mxu0
      %v1178 = vadd.f32 0.0, %v1177
      %v1179 = vpop.f32.mrf.mxu0
      %v1180 = vadd.f32 0.0, %v1179
      %1181 = vmatprep.mubr.bf16.mxu0 0
      %1182 = vmatmul.mubr.bf16.gmra.mxu0 %v910
      %v1183 = vpop.f32.mrf.mxu0
      %v1184 = vadd.f32 0.0, %v1183
      %v1185 = vpop.f32.mrf.mxu0
      %v1186 = vadd.f32 0.0, %v1185
      %v1187 = vpop.f32.mrf.mxu0
      %v1188 = vadd.f32 0.0, %v1187
      %v1189 = vpop.f32.mrf.mxu0
      %v1190 = vadd.f32 0.0, %v1189
      %1191 = vmatprep.mubr.bf16.mxu0 0
      %1192 = vmatmul.mubr.bf16.gmra.mxu0 %v911
      %v1193 = vpop.f32.mrf.mxu0
      %v1194 = vadd.f32 0.0, %v1193
      %v1195 = vpop.f32.mrf.mxu0
      %v1196 = vadd.f32 0.0, %v1195
      %v1197 = vpop.f32.mrf.mxu0
      %v1198 = vadd.f32 0.0, %v1197
      %v1199 = vpop.f32.mrf.mxu0
      %v1200 = vadd.f32 0.0, %v1199
      %1201 = vmatprep.mubr.bf16.mxu0 0
      %1202 = vmatmul.mubr.bf16.gmra.mxu0 %v912
      %v1203 = vpop.f32.mrf.mxu0
      %v1204 = vadd.f32 0.0, %v1203
      %v1205 = vpop.f32.mrf.mxu0
      %v1206 = vadd.f32 0.0, %v1205
      %v1207 = vpop.f32.mrf.mxu0
      %v1208 = vadd.f32 0.0, %v1207
      %v1209 = vpop.f32.mrf.mxu0
      %v1210 = vadd.f32 0.0, %v1209
      %1211 = vmatprep.mubr.bf16.mxu0 0
      %1212 = vmatmul.mubr.bf16.gmra.mxu0 %v913
      %v1213 = vpop.f32.mrf.mxu0
      %v1214 = vadd.f32 0.0, %v1213
      %v1215 = vpop.f32.mrf.mxu0
      %v1216 = vadd.f32 0.0, %v1215
      %v1217 = vpop.f32.mrf.mxu0
      %v1218 = vadd.f32 0.0, %v1217
      %v1219 = vpop.f32.mrf.mxu0
      %v1220 = vadd.f32 0.0, %v1219
      %1221 = vmatprep.mubr.bf16.mxu0 0
      %1222 = vmatmul.mubr.bf16.gmra.mxu0 %v914
      %v1223 = vpop.f32.mrf.mxu0
      %v1224 = vadd.f32 0.0, %v1223
      %v1225 = vpop.f32.mrf.mxu0
      %v1226 = vadd.f32 0.0, %v1225
      %v1227 = vpop.f32.mrf.mxu0
      %v1228 = vadd.f32 0.0, %v1227
      %v1229 = vpop.f32.mrf.mxu0
      %v1230 = vadd.f32 0.0, %v1229
      %1231 = vmatprep.mubr.bf16.mxu0 0
      %1232 = vmatmul.mubr.bf16.gmra.mxu0 %v915
      %v1233 = vpop.f32.mrf.mxu0
      %v1234 = vadd.f32 0.0, %v1233
      %v1235 = vpop.f32.mrf.mxu0
      %v1236 = vadd.f32 0.0, %v1235
      %v1237 = vpop.f32.mrf.mxu0
      %v1238 = vadd.f32 0.0, %v1237
      %v1239 = vpop.f32.mrf.mxu0
      %v1240 = vadd.f32 0.0, %v1239
      %1241 = vmatprep.mubr.bf16.mxu0 0
      %1242 = vmatmul.mubr.bf16.gmra.mxu0 %v916
      %v1243 = vpop.f32.mrf.mxu0
      %v1244 = vadd.f32 0.0, %v1243
      %v1245 = vpop.f32.mrf.mxu0
      %v1246 = vadd.f32 0.0, %v1245
      %v1247 = vpop.f32.mrf.mxu0
      %v1248 = vadd.f32 0.0, %v1247
      %v1249 = vpop.f32.mrf.mxu0
      %v1250 = vadd.f32 0.0, %v1249
      %1251 = vmatprep.mubr.bf16.mxu0 0
      %1252 = vmatmul.mubr.bf16.gmra.mxu0 %v917
      %v1253 = vpop.f32.mrf.mxu0
      %v1254 = vadd.f32 0.0, %v1253
      %v1255 = vpop.f32.mrf.mxu0
      %v1256 = vadd.f32 0.0, %v1255
      %v1257 = vpop.f32.mrf.mxu0
      %v1258 = vadd.f32 0.0, %v1257
      %v1259 = vpop.f32.mrf.mxu0
      %v1260 = vadd.f32 0.0, %v1259
      %1261 = vmatprep.mubr.bf16.mxu0 0
      %1262 = vmatmul.mubr.bf16.gmra.mxu0 %v918
      %v1263 = vpop.f32.mrf.mxu0
      %v1264 = vadd.f32 0.0, %v1263
      %v1265 = vpop.f32.mrf.mxu0
      %v1266 = vadd.f32 0.0, %v1265
      %v1267 = vpop.f32.mrf.mxu0
      %v1268 = vadd.f32 0.0, %v1267
      %v1269 = vpop.f32.mrf.mxu0
      %v1270 = vadd.f32 0.0, %v1269
      %1271 = vdwg.mxu0
      %1272 = vmatprep.subr.bf16.mxu0 0
      %1273 = vmatpush1.bf16.msra.mxu0 %v1054
      %1274 = vmatprep.subr.bf16.mxu0 0
      %1275 = vmatpush1.bf16.msra.mxu0 %v1051
      %1276 = vmatprep.subr.bf16.mxu0 0
      %1277 = vmatpush1.bf16.msra.mxu0 %v1048
      %1278 = vmatprep.subr.bf16.mxu0 0
      %1279 = vmatpush1.bf16.msra.mxu0 %v1045
      %1280 = vmatprep.subr.bf16.mxu0 0
      %1281 = vmatpush1.bf16.msra.mxu0 %v1042
      %1282 = vmatprep.subr.bf16.mxu0 0
      %1283 = vmatpush1.bf16.msra.mxu0 %v1039
      %1284 = vmatprep.subr.bf16.mxu0 0
      %1285 = vmatpush1.bf16.msra.mxu0 %v1036
      %1286 = vmatprep.subr.bf16.mxu0 0
      %1287 = vmatpush1.bf16.msra.mxu0 %v1033
      %1288 = vmatprep.subr.bf16.mxu0 0
      %1289 = vmatpush2.bf16.msra.mxu0 0
      %1290 = vmatprep.subr.bf16.mxu0 0
      %1291 = vmatpush2.bf16.msra.mxu0 0
      %1292 = vmatprep.subr.bf16.mxu0 0
      %1293 = vmatpush2.bf16.msra.mxu0 0
      %1294 = vmatprep.subr.bf16.mxu0 0
      %1295 = vmatpush2.bf16.msra.mxu0 0
      %1296 = vmatprep.subr.bf16.mxu0 0
      %1297 = vmatpush2.bf16.msra.mxu0 0
      %1298 = vmatprep.subr.bf16.mxu0 0
      %1299 = vmatpush2.bf16.msra.mxu0 0
      %1300 = vmatprep.subr.bf16.mxu0 0
      %1301 = vmatpush2.bf16.msra.mxu0 0
      %1302 = vmatprep.subr.bf16.mxu0 0
      %1303 = vmatpush2.bf16.msra.mxu0 0
      %1304 = vmatprep.mubr.bf16.mxu0 0
      %1305 = vmatmul.mubr.bf16.gmra.mxu0 %v903
      %v1306 = vpop.f32.mrf.mxu0
      %v1307 = vadd.f32 0.0, %v1306
      %v1308 = vpop.f32.mrf.mxu0
      %v1309 = vpop.f32.mrf.mxu0
      %v1310 = vadd.f32 0.0, %v1309
      %v1311 = vpop.f32.mrf.mxu0
      %1312 = vmatprep.mubr.bf16.mxu0 0
      %1313 = vmatmul.mubr.bf16.gmra.mxu0 %v904
      %v1314 = vpop.f32.mrf.mxu0
      %v1315 = vadd.f32 0.0, %v1314
      %v1316 = vpop.f32.mrf.mxu0
      %v1317 = vpop.f32.mrf.mxu0
      %v1318 = vadd.f32 0.0, %v1317
      %v1319 = vpop.f32.mrf.mxu0
      %1320 = vmatprep.mubr.bf16.mxu0 0
      %1321 = vmatmul.mubr.bf16.gmra.mxu0 %v905
      %v1322 = vpop.f32.mrf.mxu0
      %v1323 = vadd.f32 0.0, %v1322
      %v1324 = vpop.f32.mrf.mxu0
      %v1325 = vpop.f32.mrf.mxu0
      %v1326 = vadd.f32 0.0, %v1325
      %v1327 = vpop.f32.mrf.mxu0
      %1328 = vmatprep.mubr.bf16.mxu0 0
      %1329 = vmatmul.mubr.bf16.gmra.mxu0 %v906
      %v1330 = vpop.f32.mrf.mxu0
      %v1331 = vadd.f32 0.0, %v1330
      %v1332 = vpop.f32.mrf.mxu0
      %v1333 = vpop.f32.mrf.mxu0
      %v1334 = vadd.f32 0.0, %v1333
      %v1335 = vpop.f32.mrf.mxu0
      %1336 = vmatprep.mubr.bf16.mxu0 0
      %1337 = vmatmul.mubr.bf16.gmra.mxu0 %v907
      %v1338 = vpop.f32.mrf.mxu0
      %v1339 = vadd.f32 0.0, %v1338
      %v1340 = vpop.f32.mrf.mxu0
      %v1341 = vpop.f32.mrf.mxu0
      %v1342 = vadd.f32 0.0, %v1341
      %v1343 = vpop.f32.mrf.mxu0
      %1344 = vmatprep.mubr.bf16.mxu0 0
      %1345 = vmatmul.mubr.bf16.gmra.mxu0 %v908
      %v1346 = vpop.f32.mrf.mxu0
      %v1347 = vadd.f32 0.0, %v1346
      %v1348 = vpop.f32.mrf.mxu0
      %v1349 = vpop.f32.mrf.mxu0
      %v1350 = vadd.f32 0.0, %v1349
      %v1351 = vpop.f32.mrf.mxu0
      %1352 = vmatprep.mubr.bf16.mxu0 0
      %1353 = vmatmul.mubr.bf16.gmra.mxu0 %v909
      %v1354 = vpop.f32.mrf.mxu0
      %v1355 = vadd.f32 0.0, %v1354
      %v1356 = vpop.f32.mrf.mxu0
      %v1357 = vpop.f32.mrf.mxu0
      %v1358 = vadd.f32 0.0, %v1357
      %v1359 = vpop.f32.mrf.mxu0
      %1360 = vmatprep.mubr.bf16.mxu0 0
      %1361 = vmatmul.mubr.bf16.gmra.mxu0 %v910
      %v1362 = vpop.f32.mrf.mxu0
      %v1363 = vadd.f32 0.0, %v1362
      %v1364 = vpop.f32.mrf.mxu0
      %v1365 = vpop.f32.mrf.mxu0
      %v1366 = vadd.f32 0.0, %v1365
      %v1367 = vpop.f32.mrf.mxu0
      %1368 = vmatprep.mubr.bf16.mxu0 0
      %1369 = vmatmul.mubr.bf16.gmra.mxu0 %v911
      %v1370 = vpop.f32.mrf.mxu0
      %v1371 = vadd.f32 0.0, %v1370
      %v1372 = vpop.f32.mrf.mxu0
      %v1373 = vpop.f32.mrf.mxu0
      %v1374 = vadd.f32 0.0, %v1373
      %v1375 = vpop.f32.mrf.mxu0
      %1376 = vmatprep.mubr.bf16.mxu0 0
      %1377 = vmatmul.mubr.bf16.gmra.mxu0 %v912
      %v1378 = vpop.f32.mrf.mxu0
      %v1379 = vadd.f32 0.0, %v1378
      %v1380 = vpop.f32.mrf.mxu0
      %v1381 = vpop.f32.mrf.mxu0
      %v1382 = vadd.f32 0.0, %v1381
      %v1383 = vpop.f32.mrf.mxu0
      %1384 = vmatprep.mubr.bf16.mxu0 0
      %1385 = vmatmul.mubr.bf16.gmra.mxu0 %v913
      %v1386 = vpop.f32.mrf.mxu0
      %v1387 = vadd.f32 0.0, %v1386
      %v1388 = vpop.f32.mrf.mxu0
      %v1389 = vpop.f32.mrf.mxu0
      %v1390 = vadd.f32 0.0, %v1389
      %v1391 = vpop.f32.mrf.mxu0
      %1392 = vmatprep.mubr.bf16.mxu0 0
      %1393 = vmatmul.mubr.bf16.gmra.mxu0 %v914
      %v1394 = vpop.f32.mrf.mxu0
      %v1395 = vadd.f32 0.0, %v1394
      %v1396 = vpop.f32.mrf.mxu0
      %v1397 = vpop.f32.mrf.mxu0
      %v1398 = vadd.f32 0.0, %v1397
      %v1399 = vpop.f32.mrf.mxu0
      %1400 = vmatprep.mubr.bf16.mxu0 0
      %1401 = vmatmul.mubr.bf16.gmra.mxu0 %v915
      %v1402 = vpop.f32.mrf.mxu0
      %v1403 = vadd.f32 0.0, %v1402
      %v1404 = vpop.f32.mrf.mxu0
      %v1405 = vpop.f32.mrf.mxu0
      %v1406 = vadd.f32 0.0, %v1405
      %v1407 = vpop.f32.mrf.mxu0
      %1408 = vmatprep.mubr.bf16.mxu0 0
      %1409 = vmatmul.mubr.bf16.gmra.mxu0 %v916
      %v1410 = vpop.f32.mrf.mxu0
      %v1411 = vadd.f32 0.0, %v1410
      %v1412 = vpop.f32.mrf.mxu0
      %v1413 = vpop.f32.mrf.mxu0
      %v1414 = vadd.f32 0.0, %v1413
      %v1415 = vpop.f32.mrf.mxu0
      %1416 = vmatprep.mubr.bf16.mxu0 0
      %1417 = vmatmul.mubr.bf16.gmra.mxu0 %v917
      %v1418 = vpop.f32.mrf.mxu0
      %v1419 = vadd.f32 0.0, %v1418
      %v1420 = vpop.f32.mrf.mxu0
      %v1421 = vpop.f32.mrf.mxu0
      %v1422 = vadd.f32 0.0, %v1421
      %v1423 = vpop.f32.mrf.mxu0
      %1424 = vmatprep.mubr.bf16.mxu0 0
      %1425 = vmatmul.mubr.bf16.gmra.mxu0 %v918
      %v1426 = vpop.f32.mrf.mxu0
      %v1427 = vadd.f32 0.0, %v1426
      %v1428 = vpop.f32.mrf.mxu0
      %v1429 = vpop.f32.mrf.mxu0
      %v1430 = vadd.f32 0.0, %v1429
      %v1431 = vpop.f32.mrf.mxu0
      %1432 = vdwg.mxu0
      %v1433 = vlaneseq
      %v1434 = vshrl.u32 %v1433, 7
      %v1435 = vadd.s32 %v1434, 8
      %vm1436 = vcmp.eq.s32.totalorder %v1434, 0
      %vm1437 = vcmp.eq.s32.totalorder %v1435, 0
      %v1438 = vrot.slane %v1114, 7
      %v1439 = vrot.slane %v1118, 7
      %v1440 = vrot.slane %v1124, 7
      %v1441 = vrot.slane %v1128, 7
      %v1442 = vrot.slane %v1134, 7
      %v1443 = vrot.slane %v1138, 7
      %v1444 = vrot.slane %v1144, 7
      %v1445 = vrot.slane %v1148, 7
      %v1446 = vrot.slane %v1154, 7
      %v1447 = vrot.slane %v1158, 7
      %v1448 = vrot.slane %v1164, 7
      %v1449 = vrot.slane %v1168, 7
      %v1450 = vrot.slane %v1174, 7
      %v1451 = vrot.slane %v1178, 7
      %v1452 = vrot.slane %v1184, 7
      %v1453 = vrot.slane %v1188, 7
      %v1454 = vrot.slane %v1194, 7
      %v1455 = vrot.slane %v1198, 7
      %v1456 = vrot.slane %v1204, 7
      %v1457 = vrot.slane %v1208, 7
      %v1458 = vrot.slane %v1214, 7
      %v1459 = vrot.slane %v1218, 7
      %v1460 = vrot.slane %v1224, 7
      %v1461 = vrot.slane %v1228, 7
      %v1462 = vrot.slane %v1234, 7
      %v1463 = vrot.slane %v1238, 7
      %v1464 = vrot.slane %v1244, 7
      %v1465 = vrot.slane %v1248, 7
      %v1466 = vrot.slane %v1254, 7
      %v1467 = vrot.slane %v1258, 7
      %v1468 = vrot.slane %v1264, 7
      %v1469 = vrot.slane %v1268, 7
      %vm1470 = vcmp.lt.s32.totalorder %v1434, 1
      %v1471 = vsel %vm1470, %v1468, %v1469
      %v1472 = vsel %vm1470, %v1467, %v1468
      %v1473 = vsel %vm1470, %v1466, %v1467
      %v1474 = vsel %vm1470, %v1465, %v1466
      %v1475 = vsel %vm1470, %v1464, %v1465
      %v1476 = vsel %vm1470, %v1463, %v1464
      %v1477 = vsel %vm1470, %v1462, %v1463
      %v1478 = vsel %vm1470, %v1461, %v1462
      %v1479 = vsel %vm1470, %v1460, %v1461
      %v1480 = vsel %vm1470, %v1459, %v1460
      %v1481 = vsel %vm1470, %v1458, %v1459
      %v1482 = vsel %vm1470, %v1457, %v1458
      %v1483 = vsel %vm1470, %v1456, %v1457
      %v1484 = vsel %vm1470, %v1455, %v1456
      %v1485 = vsel %vm1470, %v1454, %v1455
      %v1486 = vsel %vm1470, %v1453, %v1454
      %v1487 = vsel %vm1470, %v1452, %v1453
      %v1488 = vsel %vm1470, %v1451, %v1452
      %v1489 = vsel %vm1470, %v1450, %v1451
      %v1490 = vsel %vm1470, %v1449, %v1450
      %v1491 = vsel %vm1470, %v1448, %v1449
      %v1492 = vsel %vm1470, %v1447, %v1448
      %v1493 = vsel %vm1470, %v1446, %v1447
      %v1494 = vsel %vm1470, %v1445, %v1446
      %v1495 = vsel %vm1470, %v1444, %v1445
      %v1496 = vsel %vm1470, %v1443, %v1444
      %v1497 = vsel %vm1470, %v1442, %v1443
      %v1498 = vsel %vm1470, %v1441, %v1442
      %v1499 = vsel %vm1470, %v1440, %v1441
      %v1500 = vsel %vm1470, %v1439, %v1440
      %v1501 = vsel %vm1470, %v1438, %v1439
      %v1502 = vsel %vm1470, %v1469, %v1438
      %v1503 = vsel %vm1436, 1, 0
      %v1504 = vsel %vm1437, 1, 0
      %vm1505 = vcmp.eq.s32.totalorder %v1503, 1
      %vm1506 = vcmp.eq.s32.totalorder %v1504, 1
      %v1507 = vsel %vm1505, 0.0, %v1502
      %v1508 = vsel %vm1506, 0.0, %v1501
      %v1509 = vsel %vm1505, 0.0, %v1500
      %v1510 = vsel %vm1506, 0.0, %v1499
      %v1511 = vsel %vm1505, 0.0, %v1498
      %v1512 = vsel %vm1506, 0.0, %v1497
      %v1513 = vsel %vm1505, 0.0, %v1496
      %v1514 = vsel %vm1506, 0.0, %v1495
      %v1515 = vsel %vm1505, 0.0, %v1494
      %v1516 = vsel %vm1506, 0.0, %v1493
      %v1517 = vsel %vm1505, 0.0, %v1492
      %v1518 = vsel %vm1506, 0.0, %v1491
      %v1519 = vsel %vm1505, 0.0, %v1490
      %v1520 = vsel %vm1506, 0.0, %v1489
      %v1521 = vsel %vm1505, 0.0, %v1488
      %v1522 = vsel %vm1506, 0.0, %v1487
      %v1523 = vsel %vm1505, 0.0, %v1486
      %v1524 = vsel %vm1506, 0.0, %v1485
      %v1525 = vsel %vm1505, 0.0, %v1484
      %v1526 = vsel %vm1506, 0.0, %v1483
      %v1527 = vsel %vm1505, 0.0, %v1482
      %v1528 = vsel %vm1506, 0.0, %v1481
      %v1529 = vsel %vm1505, 0.0, %v1480
      %v1530 = vsel %vm1506, 0.0, %v1479
      %v1531 = vsel %vm1505, 0.0, %v1478
      %v1532 = vsel %vm1506, 0.0, %v1477
      %v1533 = vsel %vm1505, 0.0, %v1476
      %v1534 = vsel %vm1506, 0.0, %v1475
      %v1535 = vsel %vm1505, 0.0, %v1474
      %v1536 = vsel %vm1506, 0.0, %v1473
      %v1537 = vsel %vm1505, 0.0, %v1472
      %v1538 = vsel %vm1506, 0.0, %v1471
      %vm1539 = vcmp.eq.s32.totalorder %v1434, 15
      %vm1540 = vcmp.eq.s32.totalorder %v1435, 15
      %v1541 = vrot.slane %v1307, 1
      %v1542 = vrot.slane %v1310, 1
      %v1543 = vrot.slane %v1315, 1
      %v1544 = vrot.slane %v1318, 1
      %v1545 = vrot.slane %v1323, 1
      %v1546 = vrot.slane %v1326, 1
      %v1547 = vrot.slane %v1331, 1
      %v1548 = vrot.slane %v1334, 1
      %v1549 = vrot.slane %v1339, 1
      %v1550 = vrot.slane %v1342, 1
      %v1551 = vrot.slane %v1347, 1
      %v1552 = vrot.slane %v1350, 1
      %v1553 = vrot.slane %v1355, 1
      %v1554 = vrot.slane %v1358, 1
      %v1555 = vrot.slane %v1363, 1
      %v1556 = vrot.slane %v1366, 1
      %v1557 = vrot.slane %v1371, 1
      %v1558 = vrot.slane %v1374, 1
      %v1559 = vrot.slane %v1379, 1
      %v1560 = vrot.slane %v1382, 1
      %v1561 = vrot.slane %v1387, 1
      %v1562 = vrot.slane %v1390, 1
      %v1563 = vrot.slane %v1395, 1
      %v1564 = vrot.slane %v1398, 1
      %v1565 = vrot.slane %v1403, 1
      %v1566 = vrot.slane %v1406, 1
      %v1567 = vrot.slane %v1411, 1
      %v1568 = vrot.slane %v1414, 1
      %v1569 = vrot.slane %v1419, 1
      %v1570 = vrot.slane %v1422, 1
      %v1571 = vrot.slane %v1427, 1
      %v1572 = vrot.slane %v1430, 1
      %vm1573 = vcmp.lt.s32.totalorder %v1434, 7
      %v1574 = vsel %vm1573, %v1571, %v1572
      %v1575 = vsel %vm1573, %v1570, %v1571
      %v1576 = vsel %vm1573, %v1569, %v1570
      %v1577 = vsel %vm1573, %v1568, %v1569
      %v1578 = vsel %vm1573, %v1567, %v1568
      %v1579 = vsel %vm1573, %v1566, %v1567
      %v1580 = vsel %vm1573, %v1565, %v1566
      %v1581 = vsel %vm1573, %v1564, %v1565
      %v1582 = vsel %vm1573, %v1563, %v1564
      %v1583 = vsel %vm1573, %v1562, %v1563
      %v1584 = vsel %vm1573, %v1561, %v1562
      %v1585 = vsel %vm1573, %v1560, %v1561
      %v1586 = vsel %vm1573, %v1559, %v1560
      %v1587 = vsel %vm1573, %v1558, %v1559
      %v1588 = vsel %vm1573, %v1557, %v1558
      %v1589 = vsel %vm1573, %v1556, %v1557
      %v1590 = vsel %vm1573, %v1555, %v1556
      %v1591 = vsel %vm1573, %v1554, %v1555
      %v1592 = vsel %vm1573, %v1553, %v1554
      %v1593 = vsel %vm1573, %v1552, %v1553
      %v1594 = vsel %vm1573, %v1551, %v1552
      %v1595 = vsel %vm1573, %v1550, %v1551
      %v1596 = vsel %vm1573, %v1549, %v1550
      %v1597 = vsel %vm1573, %v1548, %v1549
      %v1598 = vsel %vm1573, %v1547, %v1548
      %v1599 = vsel %vm1573, %v1546, %v1547
      %v1600 = vsel %vm1573, %v1545, %v1546
      %v1601 = vsel %vm1573, %v1544, %v1545
      %v1602 = vsel %vm1573, %v1543, %v1544
      %v1603 = vsel %vm1573, %v1542, %v1543
      %v1604 = vsel %vm1573, %v1541, %v1542
      %v1605 = vsel %vm1573, %v1572, %v1541
      %v1606 = vsel %vm1539, 1, 0
      %v1607 = vsel %vm1540, 1, 0
      %vm1608 = vcmp.eq.s32.totalorder %v1606, 1
      %vm1609 = vcmp.eq.s32.totalorder %v1607, 1
      %v1610 = vsel %vm1608, 0.0, %v1604
      %v1611 = vsel %vm1609, 0.0, %v1603
      %v1612 = vsel %vm1608, 0.0, %v1602
      %v1613 = vsel %vm1609, 0.0, %v1601
      %v1614 = vsel %vm1608, 0.0, %v1600
      %v1615 = vsel %vm1609, 0.0, %v1599
      %v1616 = vsel %vm1608, 0.0, %v1598
      %v1617 = vsel %vm1609, 0.0, %v1597
      %v1618 = vsel %vm1608, 0.0, %v1596
      %v1619 = vsel %vm1609, 0.0, %v1595
      %v1620 = vsel %vm1608, 0.0, %v1594
      %v1621 = vsel %vm1609, 0.0, %v1593
      %v1622 = vsel %vm1608, 0.0, %v1592
      %v1623 = vsel %vm1609, 0.0, %v1591
      %v1624 = vsel %vm1608, 0.0, %v1590
      %v1625 = vsel %vm1609, 0.0, %v1589
      %v1626 = vsel %vm1608, 0.0, %v1588
      %v1627 = vsel %vm1609, 0.0, %v1587
      %v1628 = vsel %vm1608, 0.0, %v1586
      %v1629 = vsel %vm1609, 0.0, %v1585
      %v1630 = vsel %vm1608, 0.0, %v1584
      %v1631 = vsel %vm1609, 0.0, %v1583
      %v1632 = vsel %vm1608, 0.0, %v1582
      %v1633 = vsel %vm1609, 0.0, %v1581
      %v1634 = vsel %vm1608, 0.0, %v1580
      %v1635 = vsel %vm1609, 0.0, %v1579
      %v1636 = vsel %vm1608, 0.0, %v1578
      %v1637 = vsel %vm1609, 0.0, %v1577
      %v1638 = vsel %vm1608, 0.0, %v1576
      %v1639 = vsel %vm1609, 0.0, %v1575
      %v1640 = vsel %vm1608, 0.0, %v1574
      %v1641 = vsel %vm1609, 0.0, %v1605
      %v1642 = vadd.f32 %v1116, %v1507
      %v1643 = vadd.f32 %v1120, %v1508
      %v1644 = vadd.f32 %v1126, %v1509
      %v1645 = vadd.f32 %v1130, %v1510
      %v1646 = vadd.f32 %v1136, %v1511
      %v1647 = vadd.f32 %v1140, %v1512
      %v1648 = vadd.f32 %v1146, %v1513
      %v1649 = vadd.f32 %v1150, %v1514
      %v1650 = vadd.f32 %v1156, %v1515
      %v1651 = vadd.f32 %v1160, %v1516
      %v1652 = vadd.f32 %v1166, %v1517
      %v1653 = vadd.f32 %v1170, %v1518
      %v1654 = vadd.f32 %v1176, %v1519
      %v1655 = vadd.f32 %v1180, %v1520
      %v1656 = vadd.f32 %v1186, %v1521
      %v1657 = vadd.f32 %v1190, %v1522
      %v1658 = vadd.f32 %v1196, %v1523
      %v1659 = vadd.f32 %v1200, %v1524
      %v1660 = vadd.f32 %v1206, %v1525
      %v1661 = vadd.f32 %v1210, %v1526
      %v1662 = vadd.f32 %v1216, %v1527
      %v1663 = vadd.f32 %v1220, %v1528
      %v1664 = vadd.f32 %v1226, %v1529
      %v1665 = vadd.f32 %v1230, %v1530
      %v1666 = vadd.f32 %v1236, %v1531
      %v1667 = vadd.f32 %v1240, %v1532
      %v1668 = vadd.f32 %v1246, %v1533
      %v1669 = vadd.f32 %v1250, %v1534
      %v1670 = vadd.f32 %v1256, %v1535
      %v1671 = vadd.f32 %v1260, %v1536
      %v1672 = vadd.f32 %v1266, %v1537
      %v1673 = vadd.f32 %v1270, %v1538
      %v1674 = vadd.f32 %v1642, %v1610
      %v1675 = vadd.f32 %v1643, %v1611
      %v1676 = vadd.f32 %v1644, %v1612
      %v1677 = vadd.f32 %v1645, %v1613
      %v1678 = vadd.f32 %v1646, %v1614
      %v1679 = vadd.f32 %v1647, %v1615
      %v1680 = vadd.f32 %v1648, %v1616
      %v1681 = vadd.f32 %v1649, %v1617
      %v1682 = vadd.f32 %v1650, %v1618
      %v1683 = vadd.f32 %v1651, %v1619
      %v1684 = vadd.f32 %v1652, %v1620
      %v1685 = vadd.f32 %v1653, %v1621
      %v1686 = vadd.f32 %v1654, %v1622
      %v1687 = vadd.f32 %v1655, %v1623
      %v1688 = vadd.f32 %v1656, %v1624
      %v1689 = vadd.f32 %v1657, %v1625
      %v1690 = vadd.f32 %v1658, %v1626
      %v1691 = vadd.f32 %v1659, %v1627
      %v1692 = vadd.f32 %v1660, %v1628
      %v1693 = vadd.f32 %v1661, %v1629
      %v1694 = vadd.f32 %v1662, %v1630
      %v1695 = vadd.f32 %v1663, %v1631
      %v1696 = vadd.f32 %v1664, %v1632
      %v1697 = vadd.f32 %v1665, %v1633
      %v1698 = vadd.f32 %v1666, %v1634
      %v1699 = vadd.f32 %v1667, %v1635
      %v1700 = vadd.f32 %v1668, %v1636
      %v1701 = vadd.f32 %v1669, %v1637
      %v1702 = vadd.f32 %v1670, %v1638
      %v1703 = vadd.f32 %v1671, %v1639
      %v1704 = vadd.f32 %v1672, %v1640
      %v1705 = vadd.f32 %v1673, %v1641
      %v1706 = vld [vmem:[%s4] sm:$0x1]
      %v1708 = vlaneseq
      %v1709 = vshrl.u32 %v1708, 7
      %v1710 = vsub.s32 0, %v1709
      %v1711 = vrot.slane %v1706, %v1710
      %v1713 = vadd.f32 %v1674, %v1711
      %v1714 = vadd.f32 %v1675, %v1711
      %v1715 = vadd.f32 %v1676, %v1711
      %v1716 = vadd.f32 %v1677, %v1711
      %v1717 = vadd.f32 %v1678, %v1711
      %v1718 = vadd.f32 %v1679, %v1711
      %v1719 = vadd.f32 %v1680, %v1711
      %v1720 = vadd.f32 %v1681, %v1711
      %v1721 = vadd.f32 %v1682, %v1711
      %v1722 = vadd.f32 %v1683, %v1711
      %v1723 = vadd.f32 %v1684, %v1711
      %v1724 = vadd.f32 %v1685, %v1711
      %v1725 = vadd.f32 %v1686, %v1711
      %v1726 = vadd.f32 %v1687, %v1711
      %v1727 = vadd.f32 %v1688, %v1711
      %v1728 = vadd.f32 %v1689, %v1711
      %v1729 = vadd.f32 %v1690, %v1711
      %v1730 = vadd.f32 %v1691, %v1711
      %v1731 = vadd.f32 %v1692, %v1711
      %v1732 = vadd.f32 %v1693, %v1711
      %v1733 = vadd.f32 %v1694, %v1711
      %v1734 = vadd.f32 %v1695, %v1711
      %v1735 = vadd.f32 %v1696, %v1711
      %v1736 = vadd.f32 %v1697, %v1711
      %v1737 = vadd.f32 %v1698, %v1711
      %v1738 = vadd.f32 %v1699, %v1711
      %v1739 = vadd.f32 %v1700, %v1711
      %v1740 = vadd.f32 %v1701, %v1711
      %v1741 = vadd.f32 %v1702, %v1711
      %v1742 = vadd.f32 %v1703, %v1711
      %v1743 = vadd.f32 %v1704, %v1711
      %v1744 = vadd.f32 %v1705, %v1711
      %v1745 = vmax.f32 %v1713, 0.0
      %v1746 = vmax.f32 %v1714, 0.0
      %v1747 = vmax.f32 %v1715, 0.0
      %v1748 = vmax.f32 %v1716, 0.0
      %v1749 = vmax.f32 %v1717, 0.0
      %v1750 = vmax.f32 %v1718, 0.0
      %v1751 = vmax.f32 %v1719, 0.0
      %v1752 = vmax.f32 %v1720, 0.0
      %v1753 = vmax.f32 %v1721, 0.0
      %v1754 = vmax.f32 %v1722, 0.0
      %v1755 = vmax.f32 %v1723, 0.0
      %v1756 = vmax.f32 %v1724, 0.0
      %v1757 = vmax.f32 %v1725, 0.0
      %v1758 = vmax.f32 %v1726, 0.0
      %v1759 = vmax.f32 %v1727, 0.0
      %v1760 = vmax.f32 %v1728, 0.0
      %v1761 = vmax.f32 %v1729, 0.0
      %v1762 = vmax.f32 %v1730, 0.0
      %v1763 = vmax.f32 %v1731, 0.0
      %v1764 = vmax.f32 %v1732, 0.0
      %v1765 = vmax.f32 %v1733, 0.0
      %v1766 = vmax.f32 %v1734, 0.0
      %v1767 = vmax.f32 %v1735, 0.0
      %v1768 = vmax.f32 %v1736, 0.0
      %v1769 = vmax.f32 %v1737, 0.0
      %v1770 = vmax.f32 %v1738, 0.0
      %v1771 = vmax.f32 %v1739, 0.0
      %v1772 = vmax.f32 %v1740, 0.0
      %v1773 = vmax.f32 %v1741, 0.0
      %v1774 = vmax.f32 %v1742, 0.0
      %v1775 = vmax.f32 %v1743, 0.0
      %v1776 = vmax.f32 %v1744, 0.0
      %v1777 = vmax.f32 %v1745, %v1746
      %v1778 = vrot.slane %v1777, 4
      %v1779 = vmax.f32 %v1777, %v1778
      %v1780 = vrot.slane %v1779, 2
      %v1781 = vmax.f32 %v1779, %v1780
      %v1782 = vrot.slane %v1781, 1
      %v1783 = vmax.f32 %v1781, %v1782
      %v1784 = vmax.f32 %v1747, %v1748
      %v1785 = vrot.slane %v1784, 4
      %v1786 = vmax.f32 %v1784, %v1785
      %v1787 = vrot.slane %v1786, 2
      %v1788 = vmax.f32 %v1786, %v1787
      %v1789 = vrot.slane %v1788, 1
      %v1790 = vmax.f32 %v1788, %v1789
      %v1791 = vmax.f32 %v1749, %v1750
      %v1792 = vrot.slane %v1791, 4
      %v1793 = vmax.f32 %v1791, %v1792
      %v1794 = vrot.slane %v1793, 2
      %v1795 = vmax.f32 %v1793, %v1794
      %v1796 = vrot.slane %v1795, 1
      %v1797 = vmax.f32 %v1795, %v1796
      %v1798 = vmax.f32 %v1751, %v1752
      %v1799 = vrot.slane %v1798, 4
      %v1800 = vmax.f32 %v1798, %v1799
      %v1801 = vrot.slane %v1800, 2
      %v1802 = vmax.f32 %v1800, %v1801
      %v1803 = vrot.slane %v1802, 1
      %v1804 = vmax.f32 %v1802, %v1803
      %v1805 = vmax.f32 %v1753, %v1754
      %v1806 = vrot.slane %v1805, 4
      %v1807 = vmax.f32 %v1805, %v1806
      %v1808 = vrot.slane %v1807, 2
      %v1809 = vmax.f32 %v1807, %v1808
      %v1810 = vrot.slane %v1809, 1
      %v1811 = vmax.f32 %v1809, %v1810
      %v1812 = vmax.f32 %v1755, %v1756
      %v1813 = vrot.slane %v1812, 4
      %v1814 = vmax.f32 %v1812, %v1813
      %v1815 = vrot.slane %v1814, 2
      %v1816 = vmax.f32 %v1814, %v1815
      %v1817 = vrot.slane %v1816, 1
      %v1818 = vmax.f32 %v1816, %v1817
      %v1819 = vmax.f32 %v1757, %v1758
      %v1820 = vrot.slane %v1819, 4
      %v1821 = vmax.f32 %v1819, %v1820
      %v1822 = vrot.slane %v1821, 2
      %v1823 = vmax.f32 %v1821, %v1822
      %v1824 = vrot.slane %v1823, 1
      %v1825 = vmax.f32 %v1823, %v1824
      %v1826 = vmax.f32 %v1759, %v1760
      %v1827 = vrot.slane %v1826, 4
      %v1828 = vmax.f32 %v1826, %v1827
      %v1829 = vrot.slane %v1828, 2
      %v1830 = vmax.f32 %v1828, %v1829
      %v1831 = vrot.slane %v1830, 1
      %v1832 = vmax.f32 %v1830, %v1831
      %v1833 = vmax.f32 %v1761, %v1762
      %v1834 = vrot.slane %v1833, 4
      %v1835 = vmax.f32 %v1833, %v1834
      %v1836 = vrot.slane %v1835, 2
      %v1837 = vmax.f32 %v1835, %v1836
      %v1838 = vrot.slane %v1837, 1
      %v1839 = vmax.f32 %v1837, %v1838
      %v1840 = vmax.f32 %v1763, %v1764
      %v1841 = vrot.slane %v1840, 4
      %v1842 = vmax.f32 %v1840, %v1841
      %v1843 = vrot.slane %v1842, 2
      %v1844 = vmax.f32 %v1842, %v1843
      %v1845 = vrot.slane %v1844, 1
      %v1846 = vmax.f32 %v1844, %v1845
      %v1847 = vmax.f32 %v1765, %v1766
      %v1848 = vrot.slane %v1847, 4
      %v1849 = vmax.f32 %v1847, %v1848
      %v1850 = vrot.slane %v1849, 2
      %v1851 = vmax.f32 %v1849, %v1850
      %v1852 = vrot.slane %v1851, 1
      %v1853 = vmax.f32 %v1851, %v1852
      %v1854 = vmax.f32 %v1767, %v1768
      %v1855 = vrot.slane %v1854, 4
      %v1856 = vmax.f32 %v1854, %v1855
      %v1857 = vrot.slane %v1856, 2
      %v1858 = vmax.f32 %v1856, %v1857
      %v1859 = vrot.slane %v1858, 1
      %v1860 = vmax.f32 %v1858, %v1859
      %v1861 = vmax.f32 %v1769, %v1770
      %v1862 = vrot.slane %v1861, 4
      %v1863 = vmax.f32 %v1861, %v1862
      %v1864 = vrot.slane %v1863, 2
      %v1865 = vmax.f32 %v1863, %v1864
      %v1866 = vrot.slane %v1865, 1
      %v1867 = vmax.f32 %v1865, %v1866
      %v1868 = vmax.f32 %v1771, %v1772
      %v1869 = vrot.slane %v1868, 4
      %v1870 = vmax.f32 %v1868, %v1869
      %v1871 = vrot.slane %v1870, 2
      %v1872 = vmax.f32 %v1870, %v1871
      %v1873 = vrot.slane %v1872, 1
      %v1874 = vmax.f32 %v1872, %v1873
      %v1875 = vmax.f32 %v1773, %v1774
      %v1876 = vrot.slane %v1875, 4
      %v1877 = vmax.f32 %v1875, %v1876
      %v1878 = vrot.slane %v1877, 2
      %v1879 = vmax.f32 %v1877, %v1878
      %v1880 = vrot.slane %v1879, 1
      %v1881 = vmax.f32 %v1879, %v1880
      %v1882 = vmax.f32 %v1775, %v1776
      %v1883 = vrot.slane %v1882, 4
      %v1884 = vmax.f32 %v1882, %v1883
      %v1885 = vrot.slane %v1884, 2
      %v1886 = vmax.f32 %v1884, %v1885
      %v1887 = vrot.slane %v1886, 1
      %v1888 = vmax.f32 %v1886, %v1887
      %v1889 = vpack.c.bf16 %v1783, %v1783
      %v1890 = vpack.c.bf16 %v1790, %v1790
      %v1891 = vpack.c.bf16 %v1797, %v1797
      %v1892 = vpack.c.bf16 %v1804, %v1804
      %v1893 = vpack.c.bf16 %v1811, %v1811
      %v1894 = vpack.c.bf16 %v1818, %v1818
      %v1895 = vpack.c.bf16 %v1825, %v1825
      %v1896 = vpack.c.bf16 %v1832, %v1832
      %v1897 = vpack.c.bf16 %v1839, %v1839
      %v1898 = vpack.c.bf16 %v1846, %v1846
      %v1899 = vpack.c.bf16 %v1853, %v1853
      %v1900 = vpack.c.bf16 %v1860, %v1860
      %v1901 = vpack.c.bf16 %v1867, %v1867
      %v1902 = vpack.c.bf16 %v1874, %v1874
      %v1903 = vpack.c.bf16 %v1881, %v1881
      %v1904 = vpack.c.bf16 %v1888, %v1888
      %v1905 = vld [vmem:[%s5] sm:$0xf]
      %v1906 = vld [vmem:[%s5 + $0x4] sm:$0xf]
      %v1907 = vld [vmem:[%s5 + $0x8] sm:$0xf]
      %v1908 = vld [vmem:[%s5 + $0xc] sm:$0xf]
      %v1909 = vld [vmem:[%s5 + $0x10] sm:$0xf]
      %v1910 = vld [vmem:[%s5 + $0x14] sm:$0xf]
      %v1911 = vld [vmem:[%s5 + $0x18] sm:$0xf]
      %v1912 = vld [vmem:[%s5 + $0x1c] sm:$0xf]
      %v1913 = vld [vmem:[%s5 + $0x20] sm:$0xf]
      %v1914 = vld [vmem:[%s5 + $0x24] sm:$0xf]
      %v1915 = vld [vmem:[%s5 + $0x28] sm:$0xf]
      %v1916 = vld [vmem:[%s5 + $0x2c] sm:$0xf]
      %v1917 = vld [vmem:[%s5 + $0x30] sm:$0xf]
      %v1918 = vld [vmem:[%s5 + $0x34] sm:$0xf]
      %v1919 = vld [vmem:[%s5 + $0x38] sm:$0xf]
      %v1920 = vld [vmem:[%s5 + $0x3c] sm:$0xf]
      %v1921 = vld [vmem:[%s377] sm:$0xf]
      %v1922 = vld [vmem:[%s377 + $0x4] sm:$0xf]
      %v1923 = vld [vmem:[%s6] sm:$0xf]
      %v1924 = vld [vmem:[%s6 + $0x4] sm:$0xf]
      %v1925 = vld [vmem:[%s6 + $0x8] sm:$0xf]
      %v1926 = vld [vmem:[%s6 + $0xc] sm:$0xf]
      %v1927 = vld [vmem:[%s6 + $0x10] sm:$0xf]
      %v1928 = vld [vmem:[%s6 + $0x14] sm:$0xf]
      %v1929 = vld [vmem:[%s6 + $0x18] sm:$0xf]
      %v1930 = vld [vmem:[%s6 + $0x1c] sm:$0xf]
      %v1931 = vld [vmem:[%s6 + $0x20] sm:$0xf]
      %v1932 = vld [vmem:[%s6 + $0x24] sm:$0xf]
      %v1933 = vld [vmem:[%s6 + $0x28] sm:$0xf]
      %v1934 = vld [vmem:[%s6 + $0x2c] sm:$0xf]
      %v1935 = vld [vmem:[%s6 + $0x30] sm:$0xf]
      %v1936 = vld [vmem:[%s6 + $0x34] sm:$0xf]
      %v1937 = vld [vmem:[%s6 + $0x38] sm:$0xf]
      %v1938 = vld [vmem:[%s6 + $0x3c] sm:$0xf]
      %v1941 = vunpack.c.l.b16 %v1921
      %v1942 = vunpack.c.l.b16 %v1922
      %v1943 = vpack.c.b16 %v1942, %v1941
      %v1961 = vunpack.c.l.b16 %v1923
      %v1962 = vunpack.c.l.b16 %v1924
      %v1963 = vunpack.c.l.b16 %v1925
      %v1964 = vunpack.c.l.b16 %v1926
      %v1965 = vunpack.c.l.b16 %v1927
      %v1966 = vunpack.c.l.b16 %v1928
      %v1967 = vunpack.c.l.b16 %v1929
      %v1968 = vunpack.c.l.b16 %v1930
      %v1969 = vunpack.c.l.b16 %v1931
      %v1970 = vunpack.c.l.b16 %v1932
      %v1971 = vunpack.c.l.b16 %v1933
      %v1972 = vunpack.c.l.b16 %v1934
      %v1973 = vunpack.c.l.b16 %v1935
      %v1974 = vunpack.c.l.b16 %v1936
      %v1975 = vunpack.c.l.b16 %v1937
      %v1976 = vunpack.c.l.b16 %v1938
      %v1977 = vpack.c.b16 %v1962, %v1961
      %v1978 = vpack.c.b16 %v1964, %v1963
      %v1979 = vpack.c.b16 %v1966, %v1965
      %v1980 = vpack.c.b16 %v1968, %v1967
      %v1981 = vpack.c.b16 %v1970, %v1969
      %v1982 = vpack.c.b16 %v1972, %v1971
      %v1983 = vpack.c.b16 %v1974, %v1973
      %v1984 = vpack.c.b16 %v1976, %v1975
      %1993 = vmatprep.subr.bf16.mxu0 0
      %1994 = vmatpush1.bf16.msra.mxu0 %v1984
      %1995 = vmatprep.subr.bf16.mxu0 0
      %1996 = vmatpush1.bf16.msra.mxu0 %v1983
      %1997 = vmatprep.subr.bf16.mxu0 0
      %1998 = vmatpush1.bf16.msra.mxu0 %v1982
      %1999 = vmatprep.subr.bf16.mxu0 0
      %2000 = vmatpush1.bf16.msra.mxu0 %v1981
      %2001 = vmatprep.subr.bf16.mxu0 0
      %2002 = vmatpush1.bf16.msra.mxu0 %v1980
      %2003 = vmatprep.subr.bf16.mxu0 0
      %2004 = vmatpush1.bf16.msra.mxu0 %v1979
      %2005 = vmatprep.subr.bf16.mxu0 0
      %2006 = vmatpush1.bf16.msra.mxu0 %v1978
      %2007 = vmatprep.subr.bf16.mxu0 0
      %2008 = vmatpush1.bf16.msra.mxu0 %v1977
      %2009 = vmatprep.subr.bf16.mxu0 0
      %2010 = vmatpush2.bf16.msra.mxu0 0
      %2011 = vmatprep.subr.bf16.mxu0 0
      %2012 = vmatpush2.bf16.msra.mxu0 0
      %2013 = vmatprep.subr.bf16.mxu0 0
      %2014 = vmatpush2.bf16.msra.mxu0 0
      %2015 = vmatprep.subr.bf16.mxu0 0
      %2016 = vmatpush2.bf16.msra.mxu0 0
      %2017 = vmatprep.subr.bf16.mxu0 0
      %2018 = vmatpush2.bf16.msra.mxu0 0
      %2019 = vmatprep.subr.bf16.mxu0 0
      %2020 = vmatpush2.bf16.msra.mxu0 0
      %2021 = vmatprep.subr.bf16.mxu0 0
      %2022 = vmatpush2.bf16.msra.mxu0 0
      %2023 = vmatprep.subr.bf16.mxu0 0
      %2024 = vmatpush2.bf16.msra.mxu0 0
      %2025 = vmatprep.mubr.bf16.mxu0 0
      %2026 = vmatmul.mubr.bf16.gmra.mxu0 %v1943
      %v2027 = vpop.f32.mrf.mxu0
      %v2028 = vadd.f32 0.0, %v2027
      %v2029 = vpop.f32.mrf.mxu0
      %v2030 = vpop.f32.mrf.mxu0
      %v2031 = vadd.f32 0.0, %v2030
      %v2032 = vpop.f32.mrf.mxu0
      %2033 = vdwg.mxu0
      %v2050 = vunpack.c.l.b16 %v1889
      %v2051 = vunpack.c.l.b16 %v1890
      %v2052 = vunpack.c.l.b16 %v1891
      %v2053 = vunpack.c.l.b16 %v1892
      %v2054 = vunpack.c.l.b16 %v1893
      %v2055 = vunpack.c.l.b16 %v1894
      %v2056 = vunpack.c.l.b16 %v1895
      %v2057 = vunpack.c.l.b16 %v1896
      %v2058 = vunpack.c.l.b16 %v1897
      %v2059 = vunpack.c.l.b16 %v1898
      %v2060 = vunpack.c.l.b16 %v1899
      %v2061 = vunpack.c.l.b16 %v1900
      %v2062 = vunpack.c.l.b16 %v1901
      %v2063 = vunpack.c.l.b16 %v1902
      %v2064 = vunpack.c.l.b16 %v1903
      %v2065 = vunpack.c.l.b16 %v1904
      %vm2066 = vcmask 1041409
      %v2067 = vsel %vm2066, %v2051, %v2050
      %vm2068 = vcmask 1042434
      %v2069 = vsel %vm2068, %v2052, %v2067
      %vm2070 = vcmask 1043459
      %v2071 = vsel %vm2070, %v2053, %v2069
      %vm2072 = vcmask 1044484
      %v2073 = vsel %vm2072, %v2054, %v2071
      %vm2074 = vcmask 1045509
      %v2075 = vsel %vm2074, %v2055, %v2073
      %vm2076 = vcmask 1046534
      %v2077 = vsel %vm2076, %v2056, %v2075
      %vm2078 = vcmask 1047559
      %v2079 = vsel %vm2078, %v2057, %v2077
      %v2080 = vsel %vm2066, %v2059, %v2058
      %v2081 = vsel %vm2068, %v2060, %v2080
      %v2082 = vsel %vm2070, %v2061, %v2081
      %v2083 = vsel %vm2072, %v2062, %v2082
      %v2084 = vsel %vm2074, %v2063, %v2083
      %v2085 = vsel %vm2076, %v2064, %v2084
      %v2086 = vsel %vm2078, %v2065, %v2085
      %v2087 = vpack.c.b16 %v2086, %v2079
      %v2105 = vunpack.c.l.b16 %v1905
      %v2106 = vunpack.c.l.b16 %v1906
      %v2107 = vunpack.c.l.b16 %v1907
      %v2108 = vunpack.c.l.b16 %v1908
      %v2109 = vunpack.c.l.b16 %v1909
      %v2110 = vunpack.c.l.b16 %v1910
      %v2111 = vunpack.c.l.b16 %v1911
      %v2112 = vunpack.c.l.b16 %v1912
      %v2113 = vunpack.c.l.b16 %v1913
      %v2114 = vunpack.c.l.b16 %v1914
      %v2115 = vunpack.c.l.b16 %v1915
      %v2116 = vunpack.c.l.b16 %v1916
      %v2117 = vunpack.c.l.b16 %v1917
      %v2118 = vunpack.c.l.b16 %v1918
      %v2119 = vunpack.c.l.b16 %v1919
      %v2120 = vunpack.c.l.b16 %v1920
      %v2121 = vpack.c.b16 %v2106, %v2105
      %v2122 = vpack.c.b16 %v2108, %v2107
      %v2123 = vpack.c.b16 %v2110, %v2109
      %v2124 = vpack.c.b16 %v2112, %v2111
      %v2125 = vpack.c.b16 %v2114, %v2113
      %v2126 = vpack.c.b16 %v2116, %v2115
      %v2127 = vpack.c.b16 %v2118, %v2117
      %v2128 = vpack.c.b16 %v2120, %v2119
      %2137 = vmatprep.subr.bf16.mxu0 0
      %2138 = vmatpush1.bf16.msra.mxu0 %v2128
      %2139 = vmatprep.subr.bf16.mxu0 0
      %2140 = vmatpush1.bf16.msra.mxu0 %v2127
      %2141 = vmatprep.subr.bf16.mxu0 0
      %2142 = vmatpush1.bf16.msra.mxu0 %v2126
      %2143 = vmatprep.subr.bf16.mxu0 0
      %2144 = vmatpush1.bf16.msra.mxu0 %v2125
      %2145 = vmatprep.subr.bf16.mxu0 0
      %2146 = vmatpush1.bf16.msra.mxu0 %v2124
      %2147 = vmatprep.subr.bf16.mxu0 0
      %2148 = vmatpush1.bf16.msra.mxu0 %v2123
      %2149 = vmatprep.subr.bf16.mxu0 0
      %2150 = vmatpush1.bf16.msra.mxu0 %v2122
      %2151 = vmatprep.subr.bf16.mxu0 0
      %2152 = vmatpush1.bf16.msra.mxu0 %v2121
      %2153 = vmatprep.subr.bf16.mxu0 0
      %2154 = vmatpush2.bf16.msra.mxu0 0
      %2155 = vmatprep.subr.bf16.mxu0 0
      %2156 = vmatpush2.bf16.msra.mxu0 0
      %2157 = vmatprep.subr.bf16.mxu0 0
      %2158 = vmatpush2.bf16.msra.mxu0 0
      %2159 = vmatprep.subr.bf16.mxu0 0
      %2160 = vmatpush2.bf16.msra.mxu0 0
      %2161 = vmatprep.subr.bf16.mxu0 0
      %2162 = vmatpush2.bf16.msra.mxu0 0
      %2163 = vmatprep.subr.bf16.mxu0 0
      %2164 = vmatpush2.bf16.msra.mxu0 0
      %2165 = vmatprep.subr.bf16.mxu0 0
      %2166 = vmatpush2.bf16.msra.mxu0 0
      %2167 = vmatprep.subr.bf16.mxu0 0
      %2168 = vmatpush2.bf16.msra.mxu0 0
      %2169 = vmatprep.mubr.bf16.mxu0 0
      %2170 = vmatmul.mubr.bf16.gmra.mxu0 %v2087
      %v2171 = vpop.f32.mrf.mxu0
      %v2172 = vadd.f32 %v2028, %v2171
      %v2173 = vpop.f32.mrf.mxu0
      %v2174 = vpop.f32.mrf.mxu0
      %v2175 = vadd.f32 %v2031, %v2174
      %v2176 = vpop.f32.mrf.mxu0
      %2177 = vdwg.mxu0
      %v2178 = vld [vmem:[%s7] sm:$0x1]
      %v2180 = vlaneseq
      %v2181 = vshrl.u32 %v2180, 7
      %v2182 = vsub.s32 0, %v2181
      %v2183 = vrot.slane %v2178, %v2182
      %v2185 = vadd.f32 %v2172, %v2183
      %v2186 = vadd.f32 %v2175, %v2183
      %v2187 = vmax.f32 %v2185, 0.0
      %v2188 = vmax.f32 %v2186, 0.0
      %v2189 = vpack.c.bf16 %v2188, %v2187
      %v2190 = vld [vmem:[%s8] sm:$0xf]
      %v2191 = vld [vmem:[%s8 + $0x4] sm:$0xf]
      %v2192 = vld [vmem:[%s8 + $0x8] sm:$0xf]
      %v2193 = vld [vmem:[%s8 + $0xc] sm:$0xf]
      %v2194 = vld [vmem:[%s8 + $0x10] sm:$0xf]
      %v2195 = vld [vmem:[%s8 + $0x14] sm:$0xf]
      %v2196 = vld [vmem:[%s8 + $0x18] sm:$0xf]
      %v2197 = vld [vmem:[%s8 + $0x1c] sm:$0xf]
      %v2198 = vld [vmem:[%s8 + $0x20] sm:$0xf]
      %v2199 = vld [vmem:[%s8 + $0x24] sm:$0xf]
      %v2200 = vld [vmem:[%s8 + $0x28] sm:$0xf]
      %v2201 = vld [vmem:[%s8 + $0x2c] sm:$0xf]
      %v2202 = vld [vmem:[%s8 + $0x30] sm:$0xf]
      %v2203 = vld [vmem:[%s8 + $0x34] sm:$0xf]
      %v2204 = vld [vmem:[%s8 + $0x38] sm:$0xf]
      %v2205 = vld [vmem:[%s8 + $0x3c] sm:$0xf]
      %v2206 = vld [vmem:[%s9] sm:$0x1]
      %v2208 = vlaneseq
      %v2209 = vshrl.u32 %v2208, 7
      %v2210 = vsub.s32 0, %v2209
      %v2211 = vrot.slane %v2206, %v2210
      %v2229 = vunpack.c.l.b16 %v2190
      %v2230 = vunpack.c.l.b16 %v2191
      %v2231 = vunpack.c.l.b16 %v2192
      %v2232 = vunpack.c.l.b16 %v2193
      %v2233 = vunpack.c.l.b16 %v2194
      %v2234 = vunpack.c.l.b16 %v2195
      %v2235 = vunpack.c.l.b16 %v2196
      %v2236 = vunpack.c.l.b16 %v2197
      %v2237 = vunpack.c.l.b16 %v2198
      %v2238 = vunpack.c.l.b16 %v2199
      %v2239 = vunpack.c.l.b16 %v2200
      %v2240 = vunpack.c.l.b16 %v2201
      %v2241 = vunpack.c.l.b16 %v2202
      %v2242 = vunpack.c.l.b16 %v2203
      %v2243 = vunpack.c.l.b16 %v2204
      %v2244 = vunpack.c.l.b16 %v2205
      %v2245 = vpack.c.b16 %v2230, %v2229
      %v2246 = vpack.c.b16 %v2232, %v2231
      %v2247 = vpack.c.b16 %v2234, %v2233
      %v2248 = vpack.c.b16 %v2236, %v2235
      %v2249 = vpack.c.b16 %v2238, %v2237
      %v2250 = vpack.c.b16 %v2240, %v2239
      %v2251 = vpack.c.b16 %v2242, %v2241
      %v2252 = vpack.c.b16 %v2244, %v2243
      %2261 = vmatprep.subr.bf16.mxu0 0
      %2262 = vmatpush1.bf16.msra.mxu0 %v2252
      %2263 = vmatprep.subr.bf16.mxu0 0
      %2264 = vmatpush1.bf16.msra.mxu0 %v2251
      %2265 = vmatprep.subr.bf16.mxu0 0
      %2266 = vmatpush1.bf16.msra.mxu0 %v2250
      %2267 = vmatprep.subr.bf16.mxu0 0
      %2268 = vmatpush1.bf16.msra.mxu0 %v2249
      %2269 = vmatprep.subr.bf16.mxu0 0
      %2270 = vmatpush1.bf16.msra.mxu0 %v2248
      %2271 = vmatprep.subr.bf16.mxu0 0
      %2272 = vmatpush1.bf16.msra.mxu0 %v2247
      %2273 = vmatprep.subr.bf16.mxu0 0
      %2274 = vmatpush1.bf16.msra.mxu0 %v2246
      %2275 = vmatprep.subr.bf16.mxu0 0
      %2276 = vmatpush1.bf16.msra.mxu0 %v2245
      %2277 = vmatprep.subr.bf16.mxu0 0
      %2278 = vmatpush2.bf16.msra.mxu0 0
      %2279 = vmatprep.subr.bf16.mxu0 0
      %2280 = vmatpush2.bf16.msra.mxu0 0
      %2281 = vmatprep.subr.bf16.mxu0 0
      %2282 = vmatpush2.bf16.msra.mxu0 0
      %2283 = vmatprep.subr.bf16.mxu0 0
      %2284 = vmatpush2.bf16.msra.mxu0 0
      %2285 = vmatprep.subr.bf16.mxu0 0
      %2286 = vmatpush2.bf16.msra.mxu0 0
      %2287 = vmatprep.subr.bf16.mxu0 0
      %2288 = vmatpush2.bf16.msra.mxu0 0
      %2289 = vmatprep.subr.bf16.mxu0 0
      %2290 = vmatpush2.bf16.msra.mxu0 0
      %2291 = vmatprep.subr.bf16.mxu0 0
      %2292 = vmatpush2.bf16.msra.mxu0 0
      %2293 = vmatprep.mubr.bf16.mxu0 0
      %2294 = vmatmul.mubr.bf16.gmra.mxu0 %v2189
      %v2295 = vpop.f32.mrf.mxu0
      %v2296 = vadd.f32 %v2211, %v2295
      %v2297 = vpop.f32.mrf.mxu0
      %v2298 = vpop.f32.mrf.mxu0
      %v2299 = vadd.f32 %v2211, %v2298
      %v2300 = vpop.f32.mrf.mxu0
      %2301 = vdwg.mxu0
      %2302 = vst [vmem:[%s383] sm:$0xff] %v2296
      %2303 = vst [vmem:[%s383 + $0x8] sm:$0xff] %v2299
      %s2304 = smul.u32 2, %s21
      %p2305 = scmp.lt.s32.totalorder %s2304, 3
      %s2306 = scalar_select %p2305, %s2304, 3
      %s2307 = smul.addr %s2306, 8
      %s2308 = scalar_lea.vmem %s10, %s2307
      // Predicated region
      $region61: #{bomcnn_forward.1} parent=59 // pred_check
        %p2309 = pneg %p259
      $region62: #{bomcnn_forward.1} parent=59 // pred_check_branch
        %2311 = sbr.rel (%p2309) target = $region64
      $region63: #{bomcnn_forward.1} parent=59 // pred_region
        %s2312 = smul.u32 2, %s21
      $region64: #{bomcnn_forward.1} parent=59 // pred_fallthru
        _
    $region60: #{bomcnn_forward.1} parent=5 // pred_fallthru
      _
    %p2313 = scmp.le.s32.totalorder 2, %s16
    // Predicated region
    $region65: #{bomcnn_forward.1} parent=5 // pred_check
      %p2314 = pneg %p2313
    $region66: #{bomcnn_forward.1} parent=5 // pred_check_branch
      %2316 = sbr.rel (%p2314) target = $region68
    $region67: #{bomcnn_forward.1} parent=5 // pred_region
      %s2317 = ssub.s32 %s16, 2
      // Predicated region
      $region69: #{bomcnn_forward.1} parent=67 // pred_check
        %p2318 = pneg %p265
      $region70: #{bomcnn_forward.1} parent=67 // pred_check_branch
        %2320 = sbr.rel (%p2318) target = $region72
      $region71: #{bomcnn_forward.1} parent=67 // pred_region
        %s2321 = smul.u32 2, %s22
        %p2322 = scmp.lt.s32.totalorder %s2321, 3
        %s2323 = scalar_select %p2322, %s2321, 3
        %s2324 = smul.addr %s2323, 8
        %s2325 = scalar_lea.vmem %s10, %s2324
      $region72: #{bomcnn_forward.1} parent=67 // pred_fallthru
        _
    $region68: #{bomcnn_forward.1} parent=5 // pred_fallthru
      _
  $region6: #{bomcnn_forward.1} parent=0 // loop_footer
    %s20 = sadd.s32 1, %s16
  $region7: #{bomcnn_forward.1} parent=0 // loop_footer_branch
    %15 = sbr.rel target = $region3
  $region8: #{bomcnn_forward.1} parent=0 // loop_exit
    _

</llo_original>
